<compile_context>
chip_gen: v7x
topology: tpu7x:2x2x1
jax: 0.10.0
libtpu: 0.0.40
codegen_flags: <defaults>
</compile_context>

<pallas_src>
import functools

import jax
import jax.numpy as jnp
from jax.experimental import pallas as pl
from jax.experimental.pallas import tpu as pltpu

_VMEM_LIMIT_BYTES = 32 * 1024 * 1024  # explicit; size tiles off 64 MiB on v7x


# ---------------------------------------------------------------------------
# Phase 1: LSTM recurrence (serial over time, chunked/pipelined grid over T)
# ---------------------------------------------------------------------------
def lstm_recurrence_kernel(emb_ref, wih_ref, whh_ref, b_ref, hseq_ref,
                           h_scr, c_scr, *, batch):
    """One T-chunk of the LSTM recurrence.

    emb_ref : [Tc*B, E]  bf16  (chunk of embedded inputs, time-major rows)
    wih_ref : [E, 4H]    bf16  (PyTorch weight_ih_l0.T, gate order i,f,g,o)
    whh_ref : [H, 4H]    bf16  (PyTorch weight_hh_l0.T)
    b_ref   : [1, 4H]    f32   (bias_ih + bias_hh)
    hseq_ref: [Tc*B, H]  bf16  (hidden states for this chunk)
    h_scr, c_scr : [B, H] f32  persistent VMEM state across grid steps
    """
    mb = emb_ref.shape[0]
    t_chunk = mb // batch
    H = h_scr.shape[-1]

    @pl.when(pl.program_id(0) == 0)
    def _init():
        h_scr[...] = jnp.zeros_like(h_scr)
        c_scr[...] = jnp.zeros_like(c_scr)

    # Hoisted input projection: one MXU matmul with M = Tc*B rows; bias is
    # folded in once per chunk (not re-broadcast every timestep).
    gates_x = (jnp.dot(emb_ref[...], wih_ref[...],
                       preferred_element_type=jnp.float32)
               + b_ref[...])                                    # [Tc*B, 4H] f32

    whh = whh_ref[...]                                          # [H, 4H] bf16
    h = h_scr[...]                                              # f32 (vregs)
    c = c_scr[...]

    # Fully-unrolled serial recurrence (t_chunk is small & static): only the
    # [B,H] x [H,4H] matmul and the gate math are on the sequential critical
    # path; all slice indices are static; h/c never round-trip VMEM per step.
    # NOTE: with H a multiple of 128 (real models) the per-gate slices below
    # are lane-aligned; the tiny demo H=32 only incurs minor lane selects.
    for t in range(t_chunk):
        g = gates_x[t * batch:(t + 1) * batch, :] + jnp.dot(
            h.astype(whh.dtype), whh, preferred_element_type=jnp.float32)
        i = jax.nn.sigmoid(g[:, 0 * H:1 * H])
        f = jax.nn.sigmoid(g[:, 1 * H:2 * H])
        gg = jnp.tanh(g[:, 2 * H:3 * H])
        o = jax.nn.sigmoid(g[:, 3 * H:4 * H])
        c = f * c + i * gg
        h = o * jnp.tanh(c)
        hseq_ref[t * batch:(t + 1) * batch, :] = h.astype(hseq_ref.dtype)

    # Spill state once per chunk so it survives into the next grid step.
    h_scr[...] = h
    c_scr[...] = c


# ---------------------------------------------------------------------------
# Phase 2: output Linear as large tiled matmuls (parallel over rows & vocab)
# ---------------------------------------------------------------------------
def output_projection_kernel(h_ref, wout_ref, bout_ref, out_ref):
    """out = h @ W_out + b_out for one (row-chunk, vocab-tile)."""
    out_ref[...] = (jnp.dot(h_ref[...], wout_ref[...],
                            preferred_element_type=jnp.float32)
                    + bout_ref[...]).astype(out_ref.dtype)


# ---------------------------------------------------------------------------
# Tiling helpers (shapes are static under jit)
# ---------------------------------------------------------------------------
def _choose_t_chunk(seq_len, batch, requested):
    """Largest chunk <= requested dividing T with a sublane-friendly row tile."""
    for tc in range(max(1, min(requested, seq_len)), 0, -1):
        if seq_len % tc == 0 and ((tc * batch) % 16 == 0 or tc == seq_len):
            return tc
    return seq_len


def _choose_v_tile(vocab, target):
    """Vocab tile: full V if small, else a 128-multiple divisor of V."""
    if vocab <= target:
        return vocab
    vt = (target // 128) * 128
    while vt >= 128:
        if vocab % vt == 0:
            return vt
        vt -= 128
    return vocab


# ---------------------------------------------------------------------------
# Forward pass
# ---------------------------------------------------------------------------
@functools.partial(jax.jit, static_argnames=("t_chunk", "v_tile"))
def lang_model_forward(input_sequence, params, *, t_chunk=32, v_tile=2048):
    """input_sequence: int32 [T, B]  (seq-major, nn.LSTM batch_first=False)."""
    # Embedding lookup (gather) stays in plain-JAX glue.
    emb = params["embedding"][input_sequence]                   # [T, B, E] f32
    T, B, E = emb.shape
    H = params["w_hh"].shape[0]
    V = params["w_out"].shape[1]

    tc = _choose_t_chunk(T, B, t_chunk)
    vt = _choose_v_tile(V, v_tile)
    row_tile = tc * B

    emb_flat = emb.astype(jnp.bfloat16).reshape(T * B, E)

    # ---- Phase 1: recurrence (serial; h/c persist across grid steps) -------
    h_flat = pl.pallas_call(
        functools.partial(lstm_recurrence_kernel, batch=B),
        out_shape=jax.ShapeDtypeStruct((T * B, H), jnp.bfloat16),
        grid=(T // tc,),
        in_specs=[
            pl.BlockSpec((row_tile, E), lambda i: (i, 0)),     # streamed emb
            pl.BlockSpec((E, 4 * H), lambda i: (0, 0)),        # resident weights
            pl.BlockSpec((H, 4 * H), lambda i: (0, 0)),
            pl.BlockSpec((1, 4 * H), lambda i: (0, 0)),
        ],
        out_specs=pl.BlockSpec((row_tile, H), lambda i: (i, 0)),
        scratch_shapes=[
            pltpu.VMEM((B, H), jnp.float32),   # h state
            pltpu.VMEM((B, H), jnp.float32),   # c state
        ],
        compiler_params=pltpu.CompilerParams(
            dimension_semantics=("arbitrary",),
            vmem_limit_bytes=_VMEM_LIMIT_BYTES),
    )(emb_flat, params["w_ih"], params["w_hh"], params["bias"])

    # ---- Phase 2: output Linear (embarrassingly parallel, streams W_out) ---
    logits_flat = pl.pallas_call(
        output_projection_kernel,
        out_shape=jax.ShapeDtypeStruct((T * B, V), jnp.float32),
        grid=((T * B) // row_tile, V // vt),
        in_specs=[
            pl.BlockSpec((row_tile, H), lambda i, j: (i, 0)),
            pl.BlockSpec((H, vt), lambda i, j: (0, j)),
            pl.BlockSpec((1, vt), lambda i, j: (0, j)),
        ],
        out_specs=pl.BlockSpec((row_tile, vt), lambda i, j: (i, j)),
        compiler_params=pltpu.CompilerParams(
            dimension_semantics=("parallel", "parallel"),
            vmem_limit_bytes=_VMEM_LIMIT_BYTES),
    )(h_flat, params["w_out"], params["b_out"])

    logits = logits_flat.reshape(T, B, V)
    # output = self.output(lstm_out).permute(0, 2, 1)  ->  [T, V, B]
    return jnp.transpose(logits, (0, 2, 1))


# ---------------------------------------------------------------------------
# Parameter init (matches the PyTorch module's parameterization)
# ---------------------------------------------------------------------------
def init_params(key, *, emb_size, hidden_size, output_size, pad_index=0):
    ks = jax.random.split(key, 7)
    H, E, V = hidden_size, emb_size, output_size
    bound = 1.0 / jnp.sqrt(jnp.float32(H))

    embedding = jax.random.normal(ks[0], (V, E), jnp.float32)
    # nn.Embedding(padding_idx=pad_index) zeroes the padding row at init.
    embedding = embedding.at[pad_index].set(0.0)

    w_ih = jax.random.uniform(ks[1], (E, 4 * H), jnp.float32, -bound, bound)
    w_hh = jax.random.uniform(ks[2], (H, 4 * H), jnp.float32, -bound, bound)
    b_ih = jax.random.uniform(ks[3], (4 * H,), jnp.float32, -bound, bound)
    b_hh = jax.random.uniform(ks[4], (4 * H,), jnp.float32, -bound, bound)
    w_out = jax.random.uniform(ks[5], (H, V), jnp.float32, -bound, bound)
    b_out = jax.random.uniform(ks[6], (V,), jnp.float32, -bound, bound)

    return {
        "embedding": embedding,                       # f32 table (gather in f32)
        "w_ih": w_ih.astype(jnp.bfloat16),            # MXU inputs stored bf16
        "w_hh": w_hh.astype(jnp.bfloat16),
        "bias": (b_ih + b_hh).reshape(1, 4 * H),      # f32
        "w_out": w_out.astype(jnp.bfloat16),
        "b_out": b_out.reshape(1, V),                 # f32
    }


def _reference_forward(tokens, params):
    """Pure-JAX fp32 reference (upcasts bf16 weights) for a sanity check."""
    emb = params["embedding"][tokens].astype(jnp.float32)      # [T, B, E]
    w_ih = params["w_ih"].astype(jnp.float32)
    w_hh = params["w_hh"].astype(jnp.float32)
    b = params["bias"][0]
    w_out = params["w_out"].astype(jnp.float32)
    b_out = params["b_out"][0]
    T, B, _ = emb.shape
    H = w_hh.shape[0]
    h = jnp.zeros((B, H), jnp.float32)
    c = jnp.zeros((B, H), jnp.float32)
    outs = []
    for t in range(T):
        g = emb[t] @ w_ih + h @ w_hh + b
        i = jax.nn.sigmoid(g[:, :H])
        f = jax.nn.sigmoid(g[:, H:2 * H])
        gg = jnp.tanh(g[:, 2 * H:3 * H])
        o = jax.nn.sigmoid(g[:, 3 * H:])
        c = f * c + i * gg
        h = o * jnp.tanh(c)
        outs.append(h @ w_out + b_out)
    logits = jnp.stack(outs, axis=0)                            # [T, B, V]
    return jnp.transpose(logits, (0, 2, 1))                     # [T, V, B]


if __name__ == "__main__":
    EMB, HID, VOCAB = 32, 32, 64
    T, B = 16, 2         # seq-major [T, B] (nn.LSTM default batch_first=False)

    key = jax.random.PRNGKey(0)
    pkey, tkey = jax.random.split(key)
    params = init_params(pkey, emb_size=EMB, hidden_size=HID,
                         output_size=VOCAB, pad_index=0)
    tokens = jax.random.randint(tkey, (T, B), 0, VOCAB, dtype=jnp.int32)

    # t_chunk=8 -> 2 grid steps: exercises the persistent h/c scratch carry
    # and the pl.when() first-step initialization.
    out = lang_model_forward(tokens, params, t_chunk=8)
    jax.block_until_ready(out)
    assert out.shape == (T, VOCAB, B), out.shape

    ref = _reference_forward(tokens, params)
    max_err = float(jnp.max(jnp.abs(out - ref)))
    assert max_err < 0.25, f"max abs err vs reference too large: {max_err}"

    print("KERNEL_OK")
</pallas_src>

<mosaic_0001>
module attributes {stable_mosaic.version = 11 : i64} {
  func.func @output_projection_kernel(%arg0: i32, %arg1: i32, %arg2: memref<16x32xbf16, #tpu.memory_space<vmem>>, %arg3: memref<32x64xbf16, #tpu.memory_space<vmem>>, %arg4: memref<1x64xf32, #tpu.memory_space<vmem>>, %arg5: memref<16x64xf32, #tpu.memory_space<vmem>>) attributes {dimension_semantics = [#tpu.dimension_semantics<parallel>, #tpu.dimension_semantics<parallel>], iteration_bounds = array<i64: 2, 1>, scalar_prefetch = 0 : i64, scratch_operands = 0 : i64, tpu.core_type = #tpu.core_type<tc>, window_params = [{transform_indices = @transform_0, window_bounds = array<i64: 16, 32>}, {transform_indices = @transform_1, window_bounds = array<i64: 32, 64>}, {transform_indices = @transform_2, window_bounds = array<i64: 1, 64>}, {transform_indices = @transform_3, window_bounds = array<i64: 16, 64>}]} {
    %c0 = arith.constant 0 : index
    %c0_0 = arith.constant 0 : index
    %0 = vector.load %arg2[%c0, %c0_0] : memref<16x32xbf16, #tpu.memory_space<vmem>>, vector<16x32xbf16>
    %c0_1 = arith.constant 0 : index
    %c0_2 = arith.constant 0 : index
    %1 = vector.load %arg3[%c0_1, %c0_2] : memref<32x64xbf16, #tpu.memory_space<vmem>>, vector<32x64xbf16>
    %cst = arith.constant dense<0.000000e+00> : vector<16x64xf32>
    %2 = tpu.matmul %0, %1, %cst {dimension_numbers = #tpu.dot_dimension_numbers<[1], [0], [0], [1], [0, 0, 1, 1], [], []>} : vector<16x32xbf16>, vector<32x64xbf16>, vector<16x64xf32> -> vector<16x64xf32>
    %c0_3 = arith.constant 0 : index
    %c0_4 = arith.constant 0 : index
    %3 = vector.load %arg4[%c0_3, %c0_4] : memref<1x64xf32, #tpu.memory_space<vmem>>, vector<1x64xf32>
    %4 = vector.broadcast %3 : vector<1x64xf32> to vector<16x64xf32>
    %5 = arith.addf %2, %4 : vector<16x64xf32>
    %c0_5 = arith.constant 0 : index
    %c0_6 = arith.constant 0 : index
    %6 = vector.load %arg5[%c0_5, %c0_6] : memref<16x64xf32, #tpu.memory_space<vmem>>, vector<16x64xf32>
    tpu.vector_store %arg5[%c0_5, %c0_6], %5 {strides = array<i32>} : memref<16x64xf32, #tpu.memory_space<vmem>>, vector<16x64xf32>,
    return
  }
  func.func @transform_0(%arg0: i32, %arg1: i32) -> (i32, i32) {
    %c0_i32 = arith.constant 0 : i32
    %c0_i32_0 = arith.constant 0 : i32
    return %arg0, %c0_i32 : i32, i32
  }
  func.func @transform_1(%arg0: i32, %arg1: i32) -> (i32, i32) {
    %c0_i32 = arith.constant 0 : i32
    %c0_i32_0 = arith.constant 0 : i32
    return %c0_i32, %arg1 : i32, i32
  }
  func.func @transform_2(%arg0: i32, %arg1: i32) -> (i32, i32) {
    %c0_i32 = arith.constant 0 : i32
    %c0_i32_0 = arith.constant 0 : i32
    return %c0_i32, %arg1 : i32, i32
  }
  func.func @transform_3(%arg0: i32, %arg1: i32) -> (i32, i32) {
    %c0_i32 = arith.constant 0 : i32
    return %arg0, %arg1 : i32, i32
  }
}

module attributes {stable_mosaic.version = 11 : i64} {
  func.func @lstm_recurrence_kernel(%arg0: i32, %arg1: memref<16x32xbf16, #tpu.memory_space<vmem>>, %arg2: memref<32x128xbf16, #tpu.memory_space<vmem>>, %arg3: memref<32x128xbf16, #tpu.memory_space<vmem>>, %arg4: memref<1x128xf32, #tpu.memory_space<vmem>>, %arg5: memref<16x32xbf16, #tpu.memory_space<vmem>>, %arg6: memref<2x32xf32, #tpu.memory_space<vmem>>, %arg7: memref<2x32xf32, #tpu.memory_space<vmem>>) attributes {dimension_semantics = [#tpu.dimension_semantics<arbitrary>], iteration_bounds = array<i64: 2>, scalar_prefetch = 0 : i64, scratch_operands = 2 : i64, tpu.core_type = #tpu.core_type<tc>, window_params = [{transform_indices = @transform_0, window_bounds = array<i64: 16, 32>}, {pipeline_mode = #tpu.pipeline_mode<synchronous>, transform_indices = @transform_1, window_bounds = array<i64: 32, 128>}, {pipeline_mode = #tpu.pipeline_mode<synchronous>, transform_indices = @transform_2, window_bounds = array<i64: 32, 128>}, {pipeline_mode = #tpu.pipeline_mode<synchronous>, transform_indices = @transform_3, window_bounds = array<i64: 1, 128>}, {transform_indices = @transform_4, window_bounds = array<i64: 16, 32>}]} {
    %c0_i32 = arith.constant 0 : i32
    %0 = arith.cmpi eq, %arg0, %c0_i32 : i32
    %1 = arith.extui %0 : i1 to i32
    %c0_i32_0 = arith.constant 0 : i32
    %2 = arith.cmpi ne, %1, %c0_i32_0 : i32
    scf.if %2 {
      %cst_57 = arith.constant 0.000000e+00 : f32
      %262 = vector.broadcast %cst_57 : f32 to vector<2x32xf32>
      %c0_58 = arith.constant 0 : index
      %c0_59 = arith.constant 0 : index
      %263 = vector.load %arg6[%c0_58, %c0_59] : memref<2x32xf32, #tpu.memory_space<vmem>>, vector<2x32xf32>
      tpu.vector_store %arg6[%c0_58, %c0_59], %262 {strides = array<i32>} : memref<2x32xf32, #tpu.memory_space<vmem>>, vector<2x32xf32>,
      %cst_60 = arith.constant 0.000000e+00 : f32
      %264 = vector.broadcast %cst_60 : f32 to vector<2x32xf32>
      %c0_61 = arith.constant 0 : index
      %c0_62 = arith.constant 0 : index
      %265 = vector.load %arg7[%c0_61, %c0_62] : memref<2x32xf32, #tpu.memory_space<vmem>>, vector<2x32xf32>
      tpu.vector_store %arg7[%c0_61, %c0_62], %264 {strides = array<i32>} : memref<2x32xf32, #tpu.memory_space<vmem>>, vector<2x32xf32>,
    } else {
    }
    %c0 = arith.constant 0 : index
    %c0_1 = arith.constant 0 : index
    %3 = vector.load %arg1[%c0, %c0_1] : memref<16x32xbf16, #tpu.memory_space<vmem>>, vector<16x32xbf16>
    %c0_2 = arith.constant 0 : index
    %c0_3 = arith.constant 0 : index
    %4 = vector.load %arg2[%c0_2, %c0_3] : memref<32x128xbf16, #tpu.memory_space<vmem>>, vector<32x128xbf16>
    %cst = arith.constant dense<0.000000e+00> : vector<16x128xf32>
    %5 = tpu.matmul %3, %4, %cst {dimension_numbers = #tpu.dot_dimension_numbers<[1], [0], [0], [1], [0, 0, 1, 1], [], []>} : vector<16x32xbf16>, vector<32x128xbf16>, vector<16x128xf32> -> vector<16x128xf32>
    %c0_4 = arith.constant 0 : index
    %c0_5 = arith.constant 0 : index
    %6 = vector.load %arg4[%c0_4, %c0_5] : memref<1x128xf32, #tpu.memory_space<vmem>>, vector<1x128xf32>
    %7 = vector.broadcast %6 : vector<1x128xf32> to vector<16x128xf32>
    %8 = arith.addf %5, %7 : vector<16x128xf32>
    %c0_6 = arith.constant 0 : index
    %c0_7 = arith.constant 0 : index
    %9 = vector.load %arg3[%c0_6, %c0_7] : memref<32x128xbf16, #tpu.memory_space<vmem>>, vector<32x128xbf16>
    %c0_8 = arith.constant 0 : index
    %c0_9 = arith.constant 0 : index
    %10 = vector.load %arg6[%c0_8, %c0_9] : memref<2x32xf32, #tpu.memory_space<vmem>>, vector<2x32xf32>
    %c0_10 = arith.constant 0 : index
    %c0_11 = arith.constant 0 : index
    %11 = vector.load %arg7[%c0_10, %c0_11] : memref<2x32xf32, #tpu.memory_space<vmem>>, vector<2x32xf32>
    %12 = vector.extract_strided_slice %8 {offsets = [0, 0], sizes = [2, 128], strides = [1, 1]} : vector<16x128xf32> to vector<2x128xf32>
    %13 = arith.truncf %10 : vector<2x32xf32> to vector<2x32xbf16>
    %cst_12 = arith.constant dense<0.000000e+00> : vector<2x128xf32>
    %14 = tpu.matmul %13, %9, %cst_12 {dimension_numbers = #tpu.dot_dimension_numbers<[1], [0], [0], [1], [0, 0, 1, 1], [], []>} : vector<2x32xbf16>, vector<32x128xbf16>, vector<2x128xf32> -> vector<2x128xf32>
    %15 = arith.addf %12, %14 : vector<2x128xf32>
    %16 = vector.extract_strided_slice %15 {offsets = [0, 0], sizes = [2, 32], strides = [1, 1]} : vector<2x128xf32> to vector<2x32xf32>
    %17 = arith.negf %16 : vector<2x32xf32>
    %18 = math.exp %17 : vector<2x32xf32>
    %cst_13 = arith.constant 1.000000e+00 : f32
    %19 = vector.broadcast %cst_13 : f32 to vector<2x32xf32>
    %20 = arith.addf %19, %18 : vector<2x32xf32>
    %21 = arith.divf %19, %20 : vector<2x32xf32>
    %22 = vector.extract_strided_slice %15 {offsets = [0, 32], sizes = [2, 32], strides = [1, 1]} : vector<2x128xf32> to vector<2x32xf32>
    %23 = arith.negf %22 : vector<2x32xf32>
    %24 = math.exp %23 : vector<2x32xf32>
    %cst_14 = arith.constant 1.000000e+00 : f32
    %25 = vector.broadcast %cst_14 : f32 to vector<2x32xf32>
    %26 = arith.addf %25, %24 : vector<2x32xf32>
    %27 = arith.divf %25, %26 : vector<2x32xf32>
    %28 = vector.extract_strided_slice %15 {offsets = [0, 64], sizes = [2, 32], strides = [1, 1]} : vector<2x128xf32> to vector<2x32xf32>
    %29 = math.tanh %28 : vector<2x32xf32>
    %30 = vector.extract_strided_slice %15 {offsets = [0, 96], sizes = [2, 32], strides = [1, 1]} : vector<2x128xf32> to vector<2x32xf32>
    %31 = arith.negf %30 : vector<2x32xf32>
    %32 = math.exp %31 : vector<2x32xf32>
    %cst_15 = arith.constant 1.000000e+00 : f32
    %33 = vector.broadcast %cst_15 : f32 to vector<2x32xf32>
    %34 = arith.addf %33, %32 : vector<2x32xf32>
    %35 = arith.divf %33, %34 : vector<2x32xf32>
    %36 = arith.mulf %27, %11 : vector<2x32xf32>
    %37 = arith.mulf %21, %29 : vector<2x32xf32>
    %38 = arith.addf %36, %37 : vector<2x32xf32>
    %39 = math.tanh %38 : vector<2x32xf32>
    %40 = arith.mulf %35, %39 : vector<2x32xf32>
    %41 = arith.truncf %40 : vector<2x32xf32> to vector<2x32xbf16>
    %c0_16 = arith.constant 0 : index
    %c0_17 = arith.constant 0 : index
    %42 = vector.load %arg5[%c0_16, %c0_17] : memref<16x32xbf16, #tpu.memory_space<vmem>>, vector<2x32xbf16>
    tpu.vector_store %arg5[%c0_16, %c0_17], %41 {strides = array<i32>} : memref<16x32xbf16, #tpu.memory_space<vmem>>, vector<2x32xbf16>,
    %43 = vector.extract_strided_slice %8 {offsets = [2, 0], sizes = [2, 128], strides = [1, 1]} : vector<16x128xf32> to vector<2x128xf32>
    %44 = arith.truncf %40 : vector<2x32xf32> to vector<2x32xbf16>
    %cst_18 = arith.constant dense<0.000000e+00> : vector<2x128xf32>
    %45 = tpu.matmul %44, %9, %cst_18 {dimension_numbers = #tpu.dot_dimension_numbers<[1], [0], [0], [1], [0, 0, 1, 1], [], []>} : vector<2x32xbf16>, vector<32x128xbf16>, vector<2x128xf32> -> vector<2x128xf32>
    %46 = arith.addf %43, %45 : vector<2x128xf32>
    %47 = vector.extract_strided_slice %46 {offsets = [0, 0], sizes = [2, 32], strides = [1, 1]} : vector<2x128xf32> to vector<2x32xf32>
    %48 = arith.negf %47 : vector<2x32xf32>
    %49 = math.exp %48 : vector<2x32xf32>
    %cst_19 = arith.constant 1.000000e+00 : f32
    %50 = vector.broadcast %cst_19 : f32 to vector<2x32xf32>
    %51 = arith.addf %50, %49 : vector<2x32xf32>
    %52 = arith.divf %50, %51 : vector<2x32xf32>
    %53 = vector.extract_strided_slice %46 {offsets = [0, 32], sizes = [2, 32], strides = [1, 1]} : vector<2x128xf32> to vector<2x32xf32>
    %54 = arith.negf %53 : vector<2x32xf32>
    %55 = math.exp %54 : vector<2x32xf32>
    %cst_20 = arith.constant 1.000000e+00 : f32
    %56 = vector.broadcast %cst_20 : f32 to vector<2x32xf32>
    %57 = arith.addf %56, %55 : vector<2x32xf32>
    %58 = arith.divf %56, %57 : vector<2x32xf32>
    %59 = vector.extract_strided_slice %46 {offsets = [0, 64], sizes = [2, 32], strides = [1, 1]} : vector<2x128xf32> to vector<2x32xf32>
    %60 = math.tanh %59 : vector<2x32xf32>
    %61 = vector.extract_strided_slice %46 {offsets = [0, 96], sizes = [2, 32], strides = [1, 1]} : vector<2x128xf32> to vector<2x32xf32>
    %62 = arith.negf %61 : vector<2x32xf32>
    %63 = math.exp %62 : vector<2x32xf32>
    %cst_21 = arith.constant 1.000000e+00 : f32
    %64 = vector.broadcast %cst_21 : f32 to vector<2x32xf32>
    %65 = arith.addf %64, %63 : vector<2x32xf32>
    %66 = arith.divf %64, %65 : vector<2x32xf32>
    %67 = arith.mulf %58, %38 : vector<2x32xf32>
    %68 = arith.mulf %52, %60 : vector<2x32xf32>
    %69 = arith.addf %67, %68 : vector<2x32xf32>
    %70 = math.tanh %69 : vector<2x32xf32>
    %71 = arith.mulf %66, %70 : vector<2x32xf32>
    %72 = arith.truncf %71 : vector<2x32xf32> to vector<2x32xbf16>
    %c2 = arith.constant 2 : index
    %c0_22 = arith.constant 0 : index
    %73 = vector.load %arg5[%c2, %c0_22] : memref<16x32xbf16, #tpu.memory_space<vmem>>, vector<2x32xbf16>
    tpu.vector_store %arg5[%c2, %c0_22], %72 {strides = array<i32>} : memref<16x32xbf16, #tpu.memory_space<vmem>>, vector<2x32xbf16>,
    %74 = vector.extract_strided_slice %8 {offsets = [4, 0], sizes = [2, 128], strides = [1, 1]} : vector<16x128xf32> to vector<2x128xf32>
    %75 = arith.truncf %71 : vector<2x32xf32> to vector<2x32xbf16>
    %cst_23 = arith.constant dense<0.000000e+00> : vector<2x128xf32>
    %76 = tpu.matmul %75, %9, %cst_23 {dimension_numbers = #tpu.dot_dimension_numbers<[1], [0], [0], [1], [0, 0, 1, 1], [], []>} : vector<2x32xbf16>, vector<32x128xbf16>, vector<2x128xf32> -> vector<2x128xf32>
    %77 = arith.addf %74, %76 : vector<2x128xf32>
    %78 = vector.extract_strided_slice %77 {offsets = [0, 0], sizes = [2, 32], strides = [1, 1]} : vector<2x128xf32> to vector<2x32xf32>
    %79 = arith.negf %78 : vector<2x32xf32>
    %80 = math.exp %79 : vector<2x32xf32>
    %cst_24 = arith.constant 1.000000e+00 : f32
    %81 = vector.broadcast %cst_24 : f32 to vector<2x32xf32>
    %82 = arith.addf %81, %80 : vector<2x32xf32>
    %83 = arith.divf %81, %82 : vector<2x32xf32>
    %84 = vector.extract_strided_slice %77 {offsets = [0, 32], sizes = [2, 32], strides = [1, 1]} : vector<2x128xf32> to vector<2x32xf32>
    %85 = arith.negf %84 : vector<2x32xf32>
    %86 = math.exp %85 : vector<2x32xf32>
    %cst_25 = arith.constant 1.000000e+00 : f32
    %87 = vector.broadcast %cst_25 : f32 to vector<2x32xf32>
    %88 = arith.addf %87, %86 : vector<2x32xf32>
    %89 = arith.divf %87, %88 : vector<2x32xf32>
    %90 = vector.extract_strided_slice %77 {offsets = [0, 64], sizes = [2, 32], strides = [1, 1]} : vector<2x128xf32> to vector<2x32xf32>
    %91 = math.tanh %90 : vector<2x32xf32>
    %92 = vector.extract_strided_slice %77 {offsets = [0, 96], sizes = [2, 32], strides = [1, 1]} : vector<2x128xf32> to vector<2x32xf32>
    %93 = arith.negf %92 : vector<2x32xf32>
    %94 = math.exp %93 : vector<2x32xf32>
    %cst_26 = arith.constant 1.000000e+00 : f32
    %95 = vector.broadcast %cst_26 : f32 to vector<2x32xf32>
    %96 = arith.addf %95, %94 : vector<2x32xf32>
    %97 = arith.divf %95, %96 : vector<2x32xf32>
    %98 = arith.mulf %89, %69 : vector<2x32xf32>
    %99 = arith.mulf %83, %91 : vector<2x32xf32>
    %100 = arith.addf %98, %99 : vector<2x32xf32>
    %101 = math.tanh %100 : vector<2x32xf32>
    %102 = arith.mulf %97, %101 : vector<2x32xf32>
    %103 = arith.truncf %102 : vector<2x32xf32> to vector<2x32xbf16>
    %c4 = arith.constant 4 : index
    %c0_27 = arith.constant 0 : index
    %104 = vector.load %arg5[%c4, %c0_27] : memref<16x32xbf16, #tpu.memory_space<vmem>>, vector<2x32xbf16>
    tpu.vector_store %arg5[%c4, %c0_27], %103 {strides = array<i32>} : memref<16x32xbf16, #tpu.memory_space<vmem>>, vector<2x32xbf16>,
    %105 = vector.extract_strided_slice %8 {offsets = [6, 0], sizes = [2, 128], strides = [1, 1]} : vector<16x128xf32> to vector<2x128xf32>
    %106 = arith.truncf %102 : vector<2x32xf32> to vector<2x32xbf16>
    %cst_28 = arith.constant dense<0.000000e+00> : vector<2x128xf32>
    %107 = tpu.matmul %106, %9, %cst_28 {dimension_numbers = #tpu.dot_dimension_numbers<[1], [0], [0], [1], [0, 0, 1, 1], [], []>} : vector<2x32xbf16>, vector<32x128xbf16>, vector<2x128xf32> -> vector<2x128xf32>
    %108 = arith.addf %105, %107 : vector<2x128xf32>
    %109 = vector.extract_strided_slice %108 {offsets = [0, 0], sizes = [2, 32], strides = [1, 1]} : vector<2x128xf32> to vector<2x32xf32>
    %110 = arith.negf %109 : vector<2x32xf32>
    %111 = math.exp %110 : vector<2x32xf32>
    %cst_29 = arith.constant 1.000000e+00 : f32
    %112 = vector.broadcast %cst_29 : f32 to vector<2x32xf32>
    %113 = arith.addf %112, %111 : vector<2x32xf32>
    %114 = arith.divf %112, %113 : vector<2x32xf32>
    %115 = vector.extract_strided_slice %108 {offsets = [0, 32], sizes = [2, 32], strides = [1, 1]} : vector<2x128xf32> to vector<2x32xf32>
    %116 = arith.negf %115 : vector<2x32xf32>
    %117 = math.exp %116 : vector<2x32xf32>
    %cst_30 = arith.constant 1.000000e+00 : f32
    %118 = vector.broadcast %cst_30 : f32 to vector<2x32xf32>
    %119 = arith.addf %118, %117 : vector<2x32xf32>
    %120 = arith.divf %118, %119 : vector<2x32xf32>
    %121 = vector.extract_strided_slice %108 {offsets = [0, 64], sizes = [2, 32], strides = [1, 1]} : vector<2x128xf32> to vector<2x32xf32>
    %122 = math.tanh %121 : vector<2x32xf32>
    %123 = vector.extract_strided_slice %108 {offsets = [0, 96], sizes = [2, 32], strides = [1, 1]} : vector<2x128xf32> to vector<2x32xf32>
    %124 = arith.negf %123 : vector<2x32xf32>
    %125 = math.exp %124 : vector<2x32xf32>
    %cst_31 = arith.constant 1.000000e+00 : f32
    %126 = vector.broadcast %cst_31 : f32 to vector<2x32xf32>
    %127 = arith.addf %126, %125 : vector<2x32xf32>
    %128 = arith.divf %126, %127 : vector<2x32xf32>
    %129 = arith.mulf %120, %100 : vector<2x32xf32>
    %130 = arith.mulf %114, %122 : vector<2x32xf32>
    %131 = arith.addf %129, %130 : vector<2x32xf32>
    %132 = math.tanh %131 : vector<2x32xf32>
    %133 = arith.mulf %128, %132 : vector<2x32xf32>
    %134 = arith.truncf %133 : vector<2x32xf32> to vector<2x32xbf16>
    %c6 = arith.constant 6 : index
    %c0_32 = arith.constant 0 : index
    %135 = vector.load %arg5[%c6, %c0_32] : memref<16x32xbf16, #tpu.memory_space<vmem>>, vector<2x32xbf16>
    tpu.vector_store %arg5[%c6, %c0_32], %134 {strides = array<i32>} : memref<16x32xbf16, #tpu.memory_space<vmem>>, vector<2x32xbf16>,
    %136 = vector.extract_strided_slice %8 {offsets = [8, 0], sizes = [2, 128], strides = [1, 1]} : vector<16x128xf32> to vector<2x128xf32>
    %137 = arith.truncf %133 : vector<2x32xf32> to vector<2x32xbf16>
    %cst_33 = arith.constant dense<0.000000e+00> : vector<2x128xf32>
    %138 = tpu.matmul %137, %9, %cst_33 {dimension_numbers = #tpu.dot_dimension_numbers<[1], [0], [0], [1], [0, 0, 1, 1], [], []>} : vector<2x32xbf16>, vector<32x128xbf16>, vector<2x128xf32> -> vector<2x128xf32>
    %139 = arith.addf %136, %138 : vector<2x128xf32>
    %140 = vector.extract_strided_slice %139 {offsets = [0, 0], sizes = [2, 32], strides = [1, 1]} : vector<2x128xf32> to vector<2x32xf32>
    %141 = arith.negf %140 : vector<2x32xf32>
    %142 = math.exp %141 : vector<2x32xf32>
    %cst_34 = arith.constant 1.000000e+00 : f32
    %143 = vector.broadcast %cst_34 : f32 to vector<2x32xf32>
    %144 = arith.addf %143, %142 : vector<2x32xf32>
    %145 = arith.divf %143, %144 : vector<2x32xf32>
    %146 = vector.extract_strided_slice %139 {offsets = [0, 32], sizes = [2, 32], strides = [1, 1]} : vector<2x128xf32> to vector<2x32xf32>
    %147 = arith.negf %146 : vector<2x32xf32>
    %148 = math.exp %147 : vector<2x32xf32>
    %cst_35 = arith.constant 1.000000e+00 : f32
    %149 = vector.broadcast %cst_35 : f32 to vector<2x32xf32>
    %150 = arith.addf %149, %148 : vector<2x32xf32>
    %151 = arith.divf %149, %150 : vector<2x32xf32>
    %152 = vector.extract_strided_slice %139 {offsets = [0, 64], sizes = [2, 32], strides = [1, 1]} : vector<2x128xf32> to vector<2x32xf32>
    %153 = math.tanh %152 : vector<2x32xf32>
    %154 = vector.extract_strided_slice %139 {offsets = [0, 96], sizes = [2, 32], strides = [1, 1]} : vector<2x128xf32> to vector<2x32xf32>
    %155 = arith.negf %154 : vector<2x32xf32>
    %156 = math.exp %155 : vector<2x32xf32>
    %cst_36 = arith.constant 1.000000e+00 : f32
    %157 = vector.broadcast %cst_36 : f32 to vector<2x32xf32>
    %158 = arith.addf %157, %156 : vector<2x32xf32>
    %159 = arith.divf %157, %158 : vector<2x32xf32>
    %160 = arith.mulf %151, %131 : vector<2x32xf32>
    %161 = arith.mulf %145, %153 : vector<2x32xf32>
    %162 = arith.addf %160, %161 : vector<2x32xf32>
    %163 = math.tanh %162 : vector<2x32xf32>
    %164 = arith.mulf %159, %163 : vector<2x32xf32>
    %165 = arith.truncf %164 : vector<2x32xf32> to vector<2x32xbf16>
    %c8 = arith.constant 8 : index
    %c0_37 = arith.constant 0 : index
    %166 = vector.load %arg5[%c8, %c0_37] : memref<16x32xbf16, #tpu.memory_space<vmem>>, vector<2x32xbf16>
    tpu.vector_store %arg5[%c8, %c0_37], %165 {strides = array<i32>} : memref<16x32xbf16, #tpu.memory_space<vmem>>, vector<2x32xbf16>,
    %167 = vector.extract_strided_slice %8 {offsets = [10, 0], sizes = [2, 128], strides = [1, 1]} : vector<16x128xf32> to vector<2x128xf32>
    %168 = arith.truncf %164 : vector<2x32xf32> to vector<2x32xbf16>
    %cst_38 = arith.constant dense<0.000000e+00> : vector<2x128xf32>
    %169 = tpu.matmul %168, %9, %cst_38 {dimension_numbers = #tpu.dot_dimension_numbers<[1], [0], [0], [1], [0, 0, 1, 1], [], []>} : vector<2x32xbf16>, vector<32x128xbf16>, vector<2x128xf32> -> vector<2x128xf32>
    %170 = arith.addf %167, %169 : vector<2x128xf32>
    %171 = vector.extract_strided_slice %170 {offsets = [0, 0], sizes = [2, 32], strides = [1, 1]} : vector<2x128xf32> to vector<2x32xf32>
    %172 = arith.negf %171 : vector<2x32xf32>
    %173 = math.exp %172 : vector<2x32xf32>
    %cst_39 = arith.constant 1.000000e+00 : f32
    %174 = vector.broadcast %cst_39 : f32 to vector<2x32xf32>
    %175 = arith.addf %174, %173 : vector<2x32xf32>
    %176 = arith.divf %174, %175 : vector<2x32xf32>
    %177 = vector.extract_strided_slice %170 {offsets = [0, 32], sizes = [2, 32], strides = [1, 1]} : vector<2x128xf32> to vector<2x32xf32>
    %178 = arith.negf %177 : vector<2x32xf32>
    %179 = math.exp %178 : vector<2x32xf32>
    %cst_40 = arith.constant 1.000000e+00 : f32
    %180 = vector.broadcast %cst_40 : f32 to vector<2x32xf32>
    %181 = arith.addf %180, %179 : vector<2x32xf32>
    %182 = arith.divf %180, %181 : vector<2x32xf32>
    %183 = vector.extract_strided_slice %170 {offsets = [0, 64], sizes = [2, 32], strides = [1, 1]} : vector<2x128xf32> to vector<2x32xf32>
    %184 = math.tanh %183 : vector<2x32xf32>
    %185 = vector.extract_strided_slice %170 {offsets = [0, 96], sizes = [2, 32], strides = [1, 1]} : vector<2x128xf32> to vector<2x32xf32>
    %186 = arith.negf %185 : vector<2x32xf32>
    %187 = math.exp %186 : vector<2x32xf32>
    %cst_41 = arith.constant 1.000000e+00 : f32
    %188 = vector.broadcast %cst_41 : f32 to vector<2x32xf32>
    %189 = arith.addf %188, %187 : vector<2x32xf32>
    %190 = arith.divf %188, %189 : vector<2x32xf32>
    %191 = arith.mulf %182, %162 : vector<2x32xf32>
    %192 = arith.mulf %176, %184 : vector<2x32xf32>
    %193 = arith.addf %191, %192 : vector<2x32xf32>
    %194 = math.tanh %193 : vector<2x32xf32>
    %195 = arith.mulf %190, %194 : vector<2x32xf32>
    %196 = arith.truncf %195 : vector<2x32xf32> to vector<2x32xbf16>
    %c10 = arith.constant 10 : index
    %c0_42 = arith.constant 0 : index
    %197 = vector.load %arg5[%c10, %c0_42] : memref<16x32xbf16, #tpu.memory_space<vmem>>, vector<2x32xbf16>
    tpu.vector_store %arg5[%c10, %c0_42], %196 {strides = array<i32>} : memref<16x32xbf16, #tpu.memory_space<vmem>>, vector<2x32xbf16>,
    %198 = vector.extract_strided_slice %8 {offsets = [12, 0], sizes = [2, 128], strides = [1, 1]} : vector<16x128xf32> to vector<2x128xf32>
    %199 = arith.truncf %195 : vector<2x32xf32> to vector<2x32xbf16>
    %cst_43 = arith.constant dense<0.000000e+00> : vector<2x128xf32>
    %200 = tpu.matmul %199, %9, %cst_43 {dimension_numbers = #tpu.dot_dimension_numbers<[1], [0], [0], [1], [0, 0, 1, 1], [], []>} : vector<2x32xbf16>, vector<32x128xbf16>, vector<2x128xf32> -> vector<2x128xf32>
    %201 = arith.addf %198, %200 : vector<2x128xf32>
    %202 = vector.extract_strided_slice %201 {offsets = [0, 0], sizes = [2, 32], strides = [1, 1]} : vector<2x128xf32> to vector<2x32xf32>
    %203 = arith.negf %202 : vector<2x32xf32>
    %204 = math.exp %203 : vector<2x32xf32>
    %cst_44 = arith.constant 1.000000e+00 : f32
    %205 = vector.broadcast %cst_44 : f32 to vector<2x32xf32>
    %206 = arith.addf %205, %204 : vector<2x32xf32>
    %207 = arith.divf %205, %206 : vector<2x32xf32>
    %208 = vector.extract_strided_slice %201 {offsets = [0, 32], sizes = [2, 32], strides = [1, 1]} : vector<2x128xf32> to vector<2x32xf32>
    %209 = arith.negf %208 : vector<2x32xf32>
    %210 = math.exp %209 : vector<2x32xf32>
    %cst_45 = arith.constant 1.000000e+00 : f32
    %211 = vector.broadcast %cst_45 : f32 to vector<2x32xf32>
    %212 = arith.addf %211, %210 : vector<2x32xf32>
    %213 = arith.divf %211, %212 : vector<2x32xf32>
    %214 = vector.extract_strided_slice %201 {offsets = [0, 64], sizes = [2, 32], strides = [1, 1]} : vector<2x128xf32> to vector<2x32xf32>
    %215 = math.tanh %214 : vector<2x32xf32>
    %216 = vector.extract_strided_slice %201 {offsets = [0, 96], sizes = [2, 32], strides = [1, 1]} : vector<2x128xf32> to vector<2x32xf32>
    %217 = arith.negf %216 : vector<2x32xf32>
    %218 = math.exp %217 : vector<2x32xf32>
    %cst_46 = arith.constant 1.000000e+00 : f32
    %219 = vector.broadcast %cst_46 : f32 to vector<2x32xf32>
    %220 = arith.addf %219, %218 : vector<2x32xf32>
    %221 = arith.divf %219, %220 : vector<2x32xf32>
    %222 = arith.mulf %213, %193 : vector<2x32xf32>
    %223 = arith.mulf %207, %215 : vector<2x32xf32>
    %224 = arith.addf %222, %223 : vector<2x32xf32>
    %225 = math.tanh %224 : vector<2x32xf32>
    %226 = arith.mulf %221, %225 : vector<2x32xf32>
    %227 = arith.truncf %226 : vector<2x32xf32> to vector<2x32xbf16>
    %c12 = arith.constant 12 : index
    %c0_47 = arith.constant 0 : index
    %228 = vector.load %arg5[%c12, %c0_47] : memref<16x32xbf16, #tpu.memory_space<vmem>>, vector<2x32xbf16>
    tpu.vector_store %arg5[%c12, %c0_47], %227 {strides = array<i32>} : memref<16x32xbf16, #tpu.memory_space<vmem>>, vector<2x32xbf16>,
    %229 = vector.extract_strided_slice %8 {offsets = [14, 0], sizes = [2, 128], strides = [1, 1]} : vector<16x128xf32> to vector<2x128xf32>
    %230 = arith.truncf %226 : vector<2x32xf32> to vector<2x32xbf16>
    %cst_48 = arith.constant dense<0.000000e+00> : vector<2x128xf32>
    %231 = tpu.matmul %230, %9, %cst_48 {dimension_numbers = #tpu.dot_dimension_numbers<[1], [0], [0], [1], [0, 0, 1, 1], [], []>} : vector<2x32xbf16>, vector<32x128xbf16>, vector<2x128xf32> -> vector<2x128xf32>
    %232 = arith.addf %229, %231 : vector<2x128xf32>
    %233 = vector.extract_strided_slice %232 {offsets = [0, 0], sizes = [2, 32], strides = [1, 1]} : vector<2x128xf32> to vector<2x32xf32>
    %234 = arith.negf %233 : vector<2x32xf32>
    %235 = math.exp %234 : vector<2x32xf32>
    %cst_49 = arith.constant 1.000000e+00 : f32
    %236 = vector.broadcast %cst_49 : f32 to vector<2x32xf32>
    %237 = arith.addf %236, %235 : vector<2x32xf32>
    %238 = arith.divf %236, %237 : vector<2x32xf32>
    %239 = vector.extract_strided_slice %232 {offsets = [0, 32], sizes = [2, 32], strides = [1, 1]} : vector<2x128xf32> to vector<2x32xf32>
    %240 = arith.negf %239 : vector<2x32xf32>
    %241 = math.exp %240 : vector<2x32xf32>
    %cst_50 = arith.constant 1.000000e+00 : f32
    %242 = vector.broadcast %cst_50 : f32 to vector<2x32xf32>
    %243 = arith.addf %242, %241 : vector<2x32xf32>
    %244 = arith.divf %242, %243 : vector<2x32xf32>
    %245 = vector.extract_strided_slice %232 {offsets = [0, 64], sizes = [2, 32], strides = [1, 1]} : vector<2x128xf32> to vector<2x32xf32>
    %246 = math.tanh %245 : vector<2x32xf32>
    %247 = vector.extract_strided_slice %232 {offsets = [0, 96], sizes = [2, 32], strides = [1, 1]} : vector<2x128xf32> to vector<2x32xf32>
    %248 = arith.negf %247 : vector<2x32xf32>
    %249 = math.exp %248 : vector<2x32xf32>
    %cst_51 = arith.constant 1.000000e+00 : f32
    %250 = vector.broadcast %cst_51 : f32 to vector<2x32xf32>
    %251 = arith.addf %250, %249 : vector<2x32xf32>
    %252 = arith.divf %250, %251 : vector<2x32xf32>
    %253 = arith.mulf %244, %224 : vector<2x32xf32>
    %254 = arith.mulf %238, %246 : vector<2x32xf32>
    %255 = arith.addf %253, %254 : vector<2x32xf32>
    %256 = math.tanh %255 : vector<2x32xf32>
    %257 = arith.mulf %252, %256 : vector<2x32xf32>
    %258 = arith.truncf %257 : vector<2x32xf32> to vector<2x32xbf16>
    %c14 = arith.constant 14 : index
    %c0_52 = arith.constant 0 : index
    %259 = vector.load %arg5[%c14, %c0_52] : memref<16x32xbf16, #tpu.memory_space<vmem>>, vector<2x32xbf16>
    tpu.vector_store %arg5[%c14, %c0_52], %258 {strides = array<i32>} : memref<16x32xbf16, #tpu.memory_space<vmem>>, vector<2x32xbf16>,
    %c0_53 = arith.constant 0 : index
    %c0_54 = arith.constant 0 : index
    %260 = vector.load %arg6[%c0_53, %c0_54] : memref<2x32xf32, #tpu.memory_space<vmem>>, vector<2x32xf32>
    tpu.vector_store %arg6[%c0_53, %c0_54], %257 {strides = array<i32>} : memref<2x32xf32, #tpu.memory_space<vmem>>, vector<2x32xf32>,
    %c0_55 = arith.constant 0 : index
    %c0_56 = arith.constant 0 : index
    %261 = vector.load %arg7[%c0_55, %c0_56] : memref<2x32xf32, #tpu.memory_space<vmem>>, vector<2x32xf32>
    tpu.vector_store %arg7[%c0_55, %c0_56], %255 {strides = array<i32>} : memref<2x32xf32, #tpu.memory_space<vmem>>, vector<2x32xf32>,
    return
  }
  func.func @transform_0(%arg0: i32) -> (i32, i32) {
    %c0_i32 = arith.constant 0 : i32
    %c0_i32_0 = arith.constant 0 : i32
    return %arg0, %c0_i32 : i32, i32
  }
  func.func @transform_1(%arg0: i32) -> (i32, i32) {
    %c0_i32 = arith.constant 0 : i32
    %c0_i32_0 = arith.constant 0 : i32
    %c0_i32_1 = arith.constant 0 : i32
    return %c0_i32, %c0_i32_0 : i32, i32
  }
  func.func @transform_2(%arg0: i32) -> (i32, i32) {
    %c0_i32 = arith.constant 0 : i32
    %c0_i32_0 = arith.constant 0 : i32
    %c0_i32_1 = arith.constant 0 : i32
    return %c0_i32, %c0_i32_0 : i32, i32
  }
  func.func @transform_3(%arg0: i32) -> (i32, i32) {
    %c0_i32 = arith.constant 0 : i32
    %c0_i32_0 = arith.constant 0 : i32
    %c0_i32_1 = arith.constant 0 : i32
    return %c0_i32, %c0_i32_0 : i32, i32
  }
  func.func @transform_4(%arg0: i32) -> (i32, i32) {
    %c0_i32 = arith.constant 0 : i32
    %c0_i32_0 = arith.constant 0 : i32
    return %arg0, %c0_i32 : i32, i32
  }
}

</mosaic_0001>

<llo_original>
// kernel: lang_model_forward.3
$region0: #{lang_model_forward.3}
  #allocation0 [shape = 'u32[]', space=smem, size = 0x4, offset = 0x4, fixed_abs, tag = 'smem constant byte address 0x4 - core index']
  #allocation1 [shape = 'u32[144,128]{1,0:T(1,128)}', space=vmem, size = 0x12000, scoped, tag = 'internal scratch']
  %s0 = inlined_call_operand.vmem [shape: bf16[32,32], index: 0, kind: input, shape index: {}]
  %s1 = inlined_call_operand.vmem [shape: bf16[32,64], index: 1, kind: input, shape index: {}]
  %s2 = inlined_call_operand.vmem [shape: f32[1,64], index: 2, kind: input, shape index: {}]
  %s3 = inlined_call_operand.hbm [shape: f32[32,64], index: 3, kind: output, shape index: {}]
  %s4 = sld [smem:[#allocation0]]
  $region45: #{lang_model_forward.3} parent=0
    _
  %s6 = ssub.s32 1, %s4
  %s7 = scalar_select 0, %s6, %s4
  $region1: #{lang_model_forward.3} parent=0
    #allocation2 [shape = 'u8[16384]{0}', space=vmem, size = 0x4000, scoped, tag = 'output window, operand 0']
    #allocation3 [shape = 's32[2]{0}', space=sflag, size = 0x8, scoped, tag = 'scoped memory for lang_model_forward.3']
    %8 = vsyncpa [#allocation3], 0
    %s9 = scalar_lea.sflag [#allocation3], 1
    %10 = vsyncpa %s9, 0
    loop: start=0, step=1, limit=4
    $region2: #{lang_model_forward.3} parent=1 // loop_pre_header
      _
    $region3: #{lang_model_forward.3} parent=1 // loop_header
      %s12 = sphi 0, %s16
      %p13 = scmp.ge.s32.totalorder %s12, 4
      %s19 = sphi 0, %s31
      %s20 = sphi 0, %s27
      %s21 = sphi 0, %s19
      %s22 = sphi 0, %s20
      %s23 = sphi 0, %s21
      %s24 = sphi 0, %s22
      %s34 = sphi 0, %s36
      %s37 = sphi 0, %s34
      %s38 = sphi 0, %s37
      %s54 = sphi 0, %s38
      %s60 = sphi 0, %s62
      %s63 = sphi 0, %s60
      %s64 = sphi 0, %s63
      %s80 = sphi 0, %s64
      %s86 = sphi 0, %s88
      %s89 = sphi 0, %s86
      %s90 = sphi 0, %s89
      %s106 = sphi 0, %s90
      %s114 = sphi 0, %s116
      %s117 = sphi 0, %s114
      %s118 = sphi 0, %s117
      %s134 = sphi 0, %s118
    $region4: #{lang_model_forward.3} parent=1 // loop_header_branch
      %15 = sbr.rel (%p13) target = $region8
    $region5: #{lang_model_forward.3} parent=1 // loop_body
      %s17 = ssub.s32 %s12, 1
      %s18 = ssub.s32 %s12, 2
      %s25 = sadd.s32 1, %s20
      %p26 = scmp.ge.s32.totalorder %s25, 1
      %s27 = scalar_select %p26, 0, %s25
      %s28 = sadd.s32 1, %s19
      %s29 = scalar_select %p26, %s28, %s19
      %p30 = scmp.ge.s32.totalorder %s29, 2
      %s31 = scalar_select %p30, 0, %s29
      %s32 = ssub.s32 %s19, %s31
      %p33 = scmp.eq.s32.totalorder %s32, 0
      %s35 = sadd.s32 %s34, 1
      %s36 = scalar_select %p33, %s34, %s35
      %p39 = pneg %p33
      %p40 = scmp.eq.s32.totalorder %s12, 1
      %p41 = por %p39, %p40
      %p42 = scmp.ne.s32.totalorder %s34, %s37
      %p43 = scmp.eq.s32.totalorder %s12, 0
      %p44 = por %p42, %p43
      %p45 = scmp.ne.s32.totalorder %s34, %s37
      %p46 = scmp.eq.s32.totalorder %s17, 1
      %p47 = por %p45, %p46
      %p48 = scmp.ne.s32.totalorder %s37, %s38
      %p49 = scmp.eq.s32.totalorder %s17, 0
      %p50 = por %p48, %p49
      %p51 = scmp.ne.s32.totalorder %s37, %s38
      %p52 = scmp.eq.s32.totalorder %s18, 1
      %p53 = por %p51, %p52
      %p55 = scmp.ne.s32.totalorder %s38, %s54
      %p56 = scmp.eq.s32.totalorder %s18, 0
      %p57 = por %p55, %p56
      %s58 = ssub.s32 %s20, %s27
      %p59 = scmp.eq.s32.totalorder %s58, 0
      %s61 = sadd.s32 %s60, 1
      %s62 = scalar_select %p59, %s60, %s61
      %p65 = pneg %p59
      %p66 = scmp.eq.s32.totalorder %s12, 1
      %p67 = por %p65, %p66
      %p68 = scmp.ne.s32.totalorder %s60, %s63
      %p69 = scmp.eq.s32.totalorder %s12, 0
      %p70 = por %p68, %p69
      %p71 = scmp.ne.s32.totalorder %s60, %s63
      %p72 = scmp.eq.s32.totalorder %s17, 1
      %p73 = por %p71, %p72
      %p74 = scmp.ne.s32.totalorder %s63, %s64
      %p75 = scmp.eq.s32.totalorder %s17, 0
      %p76 = por %p74, %p75
      %p77 = scmp.ne.s32.totalorder %s63, %s64
      %p78 = scmp.eq.s32.totalorder %s18, 1
      %p79 = por %p77, %p78
      %p81 = scmp.ne.s32.totalorder %s64, %s80
      %p82 = scmp.eq.s32.totalorder %s18, 0
      %p83 = por %p81, %p82
      %s84 = ssub.s32 %s20, %s27
      %p85 = scmp.eq.s32.totalorder %s84, 0
      %s87 = sadd.s32 %s86, 1
      %s88 = scalar_select %p85, %s86, %s87
      %p91 = pneg %p85
      %p92 = scmp.eq.s32.totalorder %s12, 1
      %p93 = por %p91, %p92
      %p94 = scmp.ne.s32.totalorder %s86, %s89
      %p95 = scmp.eq.s32.totalorder %s12, 0
      %p96 = por %p94, %p95
      %p97 = scmp.ne.s32.totalorder %s86, %s89
      %p98 = scmp.eq.s32.totalorder %s17, 1
      %p99 = por %p97, %p98
      %p100 = scmp.ne.s32.totalorder %s89, %s90
      %p101 = scmp.eq.s32.totalorder %s17, 0
      %p102 = por %p100, %p101
      %p103 = scmp.ne.s32.totalorder %s89, %s90
      %p104 = scmp.eq.s32.totalorder %s18, 1
      %p105 = por %p103, %p104
      %p107 = scmp.ne.s32.totalorder %s90, %s106
      %p108 = scmp.eq.s32.totalorder %s18, 0
      %p109 = por %p107, %p108
      %s110 = ssub.s32 %s19, %s31
      %s111 = ssub.s32 %s20, %s27
      %s112 = sor.u32 %s110, %s111
      %p113 = scmp.eq.s32.totalorder %s112, 0
      %s115 = sadd.s32 %s114, 1
      %s116 = scalar_select %p113, %s114, %s115
      %p119 = pneg %p113
      %p120 = scmp.eq.s32.totalorder %s12, 1
      %p121 = por %p119, %p120
      %p122 = scmp.ne.s32.totalorder %s114, %s117
      %p123 = scmp.eq.s32.totalorder %s12, 0
      %p124 = por %p122, %p123
      %p125 = scmp.ne.s32.totalorder %s114, %s117
      %p126 = scmp.eq.s32.totalorder %s17, 1
      %p127 = por %p125, %p126
      %p128 = scmp.ne.s32.totalorder %s117, %s118
      %p129 = scmp.eq.s32.totalorder %s17, 0
      %p130 = por %p128, %p129
      %p131 = scmp.ne.s32.totalorder %s117, %s118
      %p132 = scmp.eq.s32.totalorder %s18, 1
      %p133 = por %p131, %p132
      %p135 = scmp.ne.s32.totalorder %s118, %s134
      %p136 = scmp.eq.s32.totalorder %s18, 0
      %p137 = por %p135, %p136
      %p138 = scmp.le.s32.totalorder 1, %s12
      %p139 = scmp.lt.s32.totalorder %s12, 3
      %p140 = pnand %p138, %p139
      %p141 = pneg %p140
      // Predicated region
      $region9: #{lang_model_forward.3} parent=5 // pred_check
        _
      $region10: #{lang_model_forward.3} parent=5 // pred_check_branch
        %143 = sbr.rel (%p140) target = $region12
      $region11: #{lang_model_forward.3} parent=5 // pred_region
        %s144 = ssub.s32 %s12, 1
        // Predicated region
        $region13: #{lang_model_forward.3} parent=11 // pred_check
          %p145 = pneg %p76
        $region14: #{lang_model_forward.3} parent=11 // pred_check_branch
          %147 = sbr.rel (%p145) target = $region16
        $region15: #{lang_model_forward.3} parent=11 // pred_region
          %p148 = scmp.lt.s32.totalorder %s22, 0
          %s149 = scalar_select %p148, %s22, 0
          %s150 = smul.addr %s149, 4
          %s151 = scalar_lea.vmem %s1, %s150
        $region16: #{lang_model_forward.3} parent=11 // pred_fallthru
          _
        // Predicated region
        $region17: #{lang_model_forward.3} parent=11 // pred_check
          %p152 = pneg %p102
        $region18: #{lang_model_forward.3} parent=11 // pred_check_branch
          %154 = sbr.rel (%p152) target = $region20
        $region19: #{lang_model_forward.3} parent=11 // pred_region
          %p155 = scmp.lt.s32.totalorder %s22, 0
          %s156 = scalar_select %p155, %s22, 0
          %s157 = scalar_lea.vmem %s2, %s156
        $region20: #{lang_model_forward.3} parent=11 // pred_fallthru
          _
      $region12: #{lang_model_forward.3} parent=5 // pred_fallthru
        _
      %p158 = scmp.lt.s32.totalorder %s12, 2
      // Predicated region
      $region21: #{lang_model_forward.3} parent=5 // pred_check
        %p159 = pneg %p158
      $region22: #{lang_model_forward.3} parent=5 // pred_check_branch
        %161 = sbr.rel (%p159) target = $region24
      $region23: #{lang_model_forward.3} parent=5 // pred_region
        // Predicated region
        $region25: #{lang_model_forward.3} parent=23 // pred_check
          %p162 = pneg %p44
        $region26: #{lang_model_forward.3} parent=23 // pred_check_branch
          %164 = sbr.rel (%p162) target = $region28
        $region27: #{lang_model_forward.3} parent=23 // pred_region
          %s165 = smul.u32 2, %s19
          %p166 = scmp.lt.s32.totalorder %s165, 3
          %s167 = scalar_select %p166, %s165, 3
          %s168 = smul.addr %s167, 4
          %s169 = scalar_lea.vmem %s0, %s168
          %s170 = smul.u32 2, %s19
        $region28: #{lang_model_forward.3} parent=23 // pred_fallthru
          _
      $region24: #{lang_model_forward.3} parent=5 // pred_fallthru
        _
      %p171 = scmp.le.s32.totalorder 1, %s12
      %p172 = scmp.lt.s32.totalorder %s12, 3
      %p173 = pnand %p171, %p172
      %p174 = pneg %p173
      // Predicated region
      $region29: #{lang_model_forward.3} parent=5 // pred_check
        _
      $region30: #{lang_model_forward.3} parent=5 // pred_check_branch
        %176 = sbr.rel (%p173) target = $region32
      $region31: #{lang_model_forward.3} parent=5 // pred_region
        %s177 = ssub.s32 %s12, 1
        %s178 = smul.u32 2, %s21
        %p179 = scmp.lt.s32.totalorder %s178, 3
        %s180 = scalar_select %p179, %s178, 3
        %s181 = smul.addr %s180, 4
        %s182 = scalar_lea.vmem %s0, %s181
        %p183 = pneg %p50
        %p184 = pneg %p47
        %p185 = scmp.lt.s32.totalorder %s22, 0
        %s186 = scalar_select %p185, %s22, 0
        %s187 = smul.addr %s186, 4
        %s188 = scalar_lea.vmem %s1, %s187
        %p189 = pneg %p76
        %p190 = pneg %p73
        %p191 = scmp.lt.s32.totalorder %s22, 0
        %s192 = scalar_select %p191, %s22, 0
        %s193 = scalar_lea.vmem %s2, %s192
        %p194 = pneg %p102
        %p195 = pneg %p99
        %p196 = pneg %p130
        %p197 = pneg %p127
        %s198 = sand.u32 %s117, 1
        %s199 = scalar_lea.sflag [#allocation3], %s198
        %s200 = sand.u32 %s117, 1
        %s201 = smul.addr %s200, 16
        %s202 = scalar_lea.vmem [#allocation2], %s201
        %s203 = smul.u32 2, %s21
        %p204 = scmp.lt.s32.totalorder %s203, 3
        %s205 = scalar_select %p204, %s203, 3
        %s206 = smul.addr %s205, 4
        %s207 = scalar_lea.vmem %s0, %s206
        %s208 = smul.u32 2, %s21
        %p209 = scmp.lt.s32.totalorder %s22, 0
        %s210 = scalar_select %p209, %s22, 0
        %s211 = smul.addr %s210, 4
        %s212 = scalar_lea.vmem %s1, %s211
        %p213 = scmp.lt.s32.totalorder %s22, 0
        %s214 = scalar_select %p213, %s22, 0
        %s215 = scalar_lea.vmem %s2, %s214
        %s216 = smul.u32 2, %s21
        %v218 = vld [vmem:[%s207] sm:$0xf]
        %v219 = vld [vmem:[%s207 + $0x4] sm:$0xf]
        %v220 = vld [vmem:[%s212] sm:$0xf]
        %v221 = vld [vmem:[%s212 + $0x4] sm:$0xf]
        %v222 = vld [vmem:[%s212 + $0x8] sm:$0xf]
        %v223 = vld [vmem:[%s212 + $0xc] sm:$0xf]
        %v224 = vld [vmem:[%s215] sm:$0x1]
        %v226 = vlaneseq
        %v227 = vshrl.u32 %v226, 7
        %v228 = vsub.s32 0, %v227
        %v229 = vrot.slane %v224, %v228
        %v233 = vunpack.c.l.b16 %v218
        %v234 = vunpack.c.l.b16 %v219
        %v235 = vpack.c.b16 %v234, %v233
        %v240 = vunpack.c.l.b16 %v220
        %v241 = vunpack.c.l.b16 %v221
        %v242 = vunpack.c.l.b16 %v222
        %v243 = vunpack.c.l.b16 %v223
        %v244 = vpack.c.b16 %v241, %v240
        %v245 = vpack.c.b16 %v243, %v242
        %vm248 = vcmask 261120
        %v250 = vsel %vm248, %v235, 0
        %252 = vmatprep.subr.bf16.mxu0 0
        %253 = vmatpush1.bf16.msra.mxu0 %v244
        %254 = vmatprep.subr.bf16.mxu0 0
        %255 = vmatpush1.bf16.msra.mxu0 %v245
        %256 = vmatprep.subr.bf16.mxu0 0
        %257 = vmatpush1.bf16.msra.mxu0 0
        %258 = vmatprep.subr.bf16.mxu0 0
        %259 = vmatpush1.bf16.msra.mxu0 0
        %260 = vmatprep.subr.bf16.mxu0 0
        %261 = vmatpush1.bf16.msra.mxu0 0
        %262 = vmatprep.subr.bf16.mxu0 0
        %263 = vmatpush1.bf16.msra.mxu0 0
        %264 = vmatprep.subr.bf16.mxu0 0
        %265 = vmatpush1.bf16.msra.mxu0 0
        %266 = vmatprep.subr.bf16.mxu0 0
        %267 = vmatpush1.bf16.msra.mxu0 0
        %268 = vmatprep.subr.bf16.mxu0 0
        %269 = vmatpush1.bf16.msra.mxu0 0
        %270 = vmatprep.subr.bf16.mxu0 0
        %271 = vmatpush1.bf16.msra.mxu0 0
        %272 = vmatprep.subr.bf16.mxu0 0
        %273 = vmatpush1.bf16.msra.mxu0 0
        %274 = vmatprep.subr.bf16.mxu0 0
        %275 = vmatpush1.bf16.msra.mxu0 0
        %276 = vmatprep.subr.bf16.mxu0 0
        %277 = vmatpush1.bf16.msra.mxu0 0
        %278 = vmatprep.subr.bf16.mxu0 0
        %279 = vmatpush1.bf16.msra.mxu0 0
        %280 = vmatprep.subr.bf16.mxu0 0
        %281 = vmatpush1.bf16.msra.mxu0 0
        %282 = vmatprep.subr.bf16.mxu0 0
        %283 = vmatpush1.bf16.msra.mxu0 0
        %284 = vmatprep.mubr.bf16.mxu0 0
        %285 = vmatmul.mubr.bf16.gmra.mrb[0].mxu0 %v250
        %v286 = vpop.f32.mrb[0].mxu0
        %v287 = vadd.f32 %v229, %v286
        %v288 = vpop.f32.mrb[0].mxu0
        %v289 = vpop.f32.mrb[0].mxu0
        %v290 = vadd.f32 %v229, %v289
        %v291 = vpop.f32.mrb[0].mxu0
        %292 = vdwg.mxu0
        %vm293 = vcmask 523264
        %294 = vst.msk [vmem:[%s202] sm:$0xff] %vm293, %v287
        %295 = vst.msk [vmem:[%s202 + $0x8] sm:$0xff] %vm293, %v290
        %s296 = sand.u32 %s117, 1
        %s297 = scalar_lea.sflag [#allocation3], %s296
        %s298 = sand.u32 %s117, 1
        %s299 = smul.addr %s298, 16
        %s300 = scalar_lea.vmem [#allocation2], %s299
        // Predicated region
        $region33: #{lang_model_forward.3} parent=31 // pred_check
          %p301 = pneg %p127
        $region34: #{lang_model_forward.3} parent=31 // pred_check_branch
          %303 = sbr.rel (%p301) target = $region36
        $region35: #{lang_model_forward.3} parent=31 // pred_region
          %s304 = smul.u32 2, %s21
          %s306 = ssub.s32 256, 256
          %307 = vsyncadd %s297, %s306
          %s308 = sadd.s32 %s22, %s304
          %s309 = smul.addr %s308, 128
          %s310 = scalar_lea.hbm %s3, %s309
          %s311 = sshll.u32 %s300, 4
          %s312 = int_to_ptr.vmem [resolvable:$true] %s311
          %317 = dma.vmem_to_hbm [thread:$0]  %s312, 256, %s310, %s297, 128, 128, 8
        $region36: #{lang_model_forward.3} parent=31 // pred_fallthru
          _
      $region32: #{lang_model_forward.3} parent=5 // pred_fallthru
        _
      %p318 = scmp.le.s32.totalorder 2, %s12
      // Predicated region
      $region37: #{lang_model_forward.3} parent=5 // pred_check
        %p319 = pneg %p318
      $region38: #{lang_model_forward.3} parent=5 // pred_check_branch
        %321 = sbr.rel (%p319) target = $region40
      $region39: #{lang_model_forward.3} parent=5 // pred_region
        %s322 = ssub.s32 %s12, 2
        // Predicated region
        $region41: #{lang_model_forward.3} parent=39 // pred_check
          %p323 = pneg %p133
        $region42: #{lang_model_forward.3} parent=39 // pred_check_branch
          %325 = sbr.rel (%p323) target = $region44
        $region43: #{lang_model_forward.3} parent=39 // pred_region
          %s326 = sand.u32 %s118, 1
          %s327 = scalar_lea.sflag [#allocation3], %s326
          %s328 = sand.u32 %s118, 1
          %s329 = smul.addr %s328, 16
          %s330 = scalar_lea.vmem [#allocation2], %s329
          %331 = dma.done %s327, 256
        $region44: #{lang_model_forward.3} parent=39 // pred_fallthru
          _
      $region40: #{lang_model_forward.3} parent=5 // pred_fallthru
        _
    $region6: #{lang_model_forward.3} parent=1 // loop_footer
      %s16 = sadd.s32 1, %s12
    $region7: #{lang_model_forward.3} parent=1 // loop_footer_branch
      %11 = sbr.rel target = $region3
    $region8: #{lang_model_forward.3} parent=1 // loop_exit
      _
    %332 = vsyncpa [#allocation3], 1
    %s333 = scalar_lea.sflag [#allocation3], 1
    %334 = vsyncpa %s333, 1

// kernel: lang_model_forward.2
$region0: #{lang_model_forward.2}
  #allocation0 [shape = 'u32[]', space=smem, size = 0x4, offset = 0x4, fixed_abs, tag = 'smem constant byte address 0x4 - core index']
  #allocation1 [shape = 'u32[144,128]{1,0:T(1,128)}', space=vmem, size = 0x12000, scoped, tag = 'internal scratch']
  #allocation2 [shape = 'f32[2,32]{1,0:T(2,128)}', space=vmem, size = 0x400, scoped, tag = 'scratch operand']
  #allocation3 [shape = 'f32[2,32]{1,0:T(2,128)}', space=vmem, size = 0x400, scoped, tag = 'scratch operand']
  %s0 = inlined_call_operand.vmem [shape: bf16[32,32], index: 0, kind: input, shape index: {}]
  %s1 = inlined_call_operand.vmem [shape: bf16[32,128], index: 1, kind: input, shape index: {}]
  %s2 = inlined_call_operand.vmem [shape: bf16[32,128], index: 2, kind: input, shape index: {}]
  %s3 = inlined_call_operand.vmem [shape: f32[1,128], index: 3, kind: input, shape index: {}]
  %s4 = inlined_call_operand.vmem [shape: bf16[32,32], index: 4, kind: output, shape index: {}]
  %s5 = sld [smem:[#allocation0]]
  $region53: #{lang_model_forward.2} parent=0
    _
  %s7 = ssub.s32 1, %s5
  %s8 = scalar_select 0, %s7, %s5
  loop: start=0, step=1, limit=4
  $region2: #{lang_model_forward.2} parent=0 // loop_pre_header
    _
  $region3: #{lang_model_forward.2} parent=0 // loop_header
    %s10 = sphi 0, %s14
    %p11 = scmp.ge.s32.totalorder %s10, 4
    %s20 = sphi 0, %s22
    %s23 = sphi 0, %s20
    %s24 = sphi 0, %s23
    %s40 = sphi 0, %s24
    %s44 = sphi 0, %s44
    %s46 = sphi 0, %s44
    %s47 = sphi 0, %s46
    %s61 = sphi 0, %s47
    %s65 = sphi 0, %s65
    %s67 = sphi 0, %s65
    %s68 = sphi 0, %s67
    %s82 = sphi 0, %s68
    %s86 = sphi 0, %s86
    %s88 = sphi 0, %s86
    %s89 = sphi 0, %s88
    %s103 = sphi 0, %s89
    %s109 = sphi 0, %s111
    %s112 = sphi 0, %s109
    %s113 = sphi 0, %s112
    %s129 = sphi 0, %s113
  $region4: #{lang_model_forward.2} parent=0 // loop_header_branch
    %13 = sbr.rel (%p11) target = $region8
  $region5: #{lang_model_forward.2} parent=0 // loop_body
    %s15 = ssub.s32 %s10, 1
    %s16 = ssub.s32 %s10, 2
    %s17 = sadd.s32 %s10, 1
    %s18 = ssub.s32 %s10, %s17
    %p19 = scmp.eq.s32.totalorder %s18, 0
    %s21 = sadd.s32 %s20, 1
    %s22 = scalar_select %p19, %s20, %s21
    %p25 = pneg %p19
    %p26 = scmp.eq.s32.totalorder %s10, 1
    %p27 = por %p25, %p26
    %p28 = scmp.ne.s32.totalorder %s20, %s23
    %p29 = scmp.eq.s32.totalorder %s10, 0
    %p30 = por %p28, %p29
    %p31 = scmp.ne.s32.totalorder %s20, %s23
    %p32 = scmp.eq.s32.totalorder %s15, 1
    %p33 = por %p31, %p32
    %p34 = scmp.ne.s32.totalorder %s23, %s24
    %p35 = scmp.eq.s32.totalorder %s15, 0
    %p36 = por %p34, %p35
    %p37 = scmp.ne.s32.totalorder %s23, %s24
    %p38 = scmp.eq.s32.totalorder %s16, 1
    %p39 = por %p37, %p38
    %p41 = scmp.ne.s32.totalorder %s24, %s40
    %p42 = scmp.eq.s32.totalorder %s16, 0
    %p43 = por %p41, %p42
    %s45 = sadd.s32 %s44, 1
    %p48 = scmp.eq.s32.totalorder %s10, 1
    %p49 = scmp.ne.s32.totalorder %s44, %s46
    %p50 = scmp.eq.s32.totalorder %s10, 0
    %p51 = por %p49, %p50
    %p52 = scmp.ne.s32.totalorder %s44, %s46
    %p53 = scmp.eq.s32.totalorder %s15, 1
    %p54 = por %p52, %p53
    %p55 = scmp.ne.s32.totalorder %s46, %s47
    %p56 = scmp.eq.s32.totalorder %s15, 0
    %p57 = por %p55, %p56
    %p58 = scmp.ne.s32.totalorder %s46, %s47
    %p59 = scmp.eq.s32.totalorder %s16, 1
    %p60 = por %p58, %p59
    %p62 = scmp.ne.s32.totalorder %s47, %s61
    %p63 = scmp.eq.s32.totalorder %s16, 0
    %p64 = por %p62, %p63
    %s66 = sadd.s32 %s65, 1
    %p69 = scmp.eq.s32.totalorder %s10, 1
    %p70 = scmp.ne.s32.totalorder %s65, %s67
    %p71 = scmp.eq.s32.totalorder %s10, 0
    %p72 = por %p70, %p71
    %p73 = scmp.ne.s32.totalorder %s65, %s67
    %p74 = scmp.eq.s32.totalorder %s15, 1
    %p75 = por %p73, %p74
    %p76 = scmp.ne.s32.totalorder %s67, %s68
    %p77 = scmp.eq.s32.totalorder %s15, 0
    %p78 = por %p76, %p77
    %p79 = scmp.ne.s32.totalorder %s67, %s68
    %p80 = scmp.eq.s32.totalorder %s16, 1
    %p81 = por %p79, %p80
    %p83 = scmp.ne.s32.totalorder %s68, %s82
    %p84 = scmp.eq.s32.totalorder %s16, 0
    %p85 = por %p83, %p84
    %s87 = sadd.s32 %s86, 1
    %p90 = scmp.eq.s32.totalorder %s10, 1
    %p91 = scmp.ne.s32.totalorder %s86, %s88
    %p92 = scmp.eq.s32.totalorder %s10, 0
    %p93 = por %p91, %p92
    %p94 = scmp.ne.s32.totalorder %s86, %s88
    %p95 = scmp.eq.s32.totalorder %s15, 1
    %p96 = por %p94, %p95
    %p97 = scmp.ne.s32.totalorder %s88, %s89
    %p98 = scmp.eq.s32.totalorder %s15, 0
    %p99 = por %p97, %p98
    %p100 = scmp.ne.s32.totalorder %s88, %s89
    %p101 = scmp.eq.s32.totalorder %s16, 1
    %p102 = por %p100, %p101
    %p104 = scmp.ne.s32.totalorder %s89, %s103
    %p105 = scmp.eq.s32.totalorder %s16, 0
    %p106 = por %p104, %p105
    %s107 = ssub.s32 %s10, %s17
    %p108 = scmp.eq.s32.totalorder %s107, 0
    %s110 = sadd.s32 %s109, 1
    %s111 = scalar_select %p108, %s109, %s110
    %p114 = pneg %p108
    %p115 = scmp.eq.s32.totalorder %s10, 1
    %p116 = por %p114, %p115
    %p117 = scmp.ne.s32.totalorder %s109, %s112
    %p118 = scmp.eq.s32.totalorder %s10, 0
    %p119 = por %p117, %p118
    %p120 = scmp.ne.s32.totalorder %s109, %s112
    %p121 = scmp.eq.s32.totalorder %s15, 1
    %p122 = por %p120, %p121
    %p123 = scmp.ne.s32.totalorder %s112, %s113
    %p124 = scmp.eq.s32.totalorder %s15, 0
    %p125 = por %p123, %p124
    %p126 = scmp.ne.s32.totalorder %s112, %s113
    %p127 = scmp.eq.s32.totalorder %s16, 1
    %p128 = por %p126, %p127
    %p130 = scmp.ne.s32.totalorder %s113, %s129
    %p131 = scmp.eq.s32.totalorder %s16, 0
    %p132 = por %p130, %p131
    %p133 = scmp.le.s32.totalorder 1, %s10
    %p134 = scmp.lt.s32.totalorder %s10, 3
    %p135 = pnand %p133, %p134
    %p136 = pneg %p135
    // Predicated region
    $region9: #{lang_model_forward.2} parent=5 // pred_check
      _
    $region10: #{lang_model_forward.2} parent=5 // pred_check_branch
      %138 = sbr.rel (%p135) target = $region12
    $region11: #{lang_model_forward.2} parent=5 // pred_region
      %s139 = ssub.s32 %s10, 1
      // Predicated region
      $region13: #{lang_model_forward.2} parent=11 // pred_check
        %p140 = pneg %p57
      $region14: #{lang_model_forward.2} parent=11 // pred_check_branch
        %142 = sbr.rel (%p140) target = $region16
      $region15: #{lang_model_forward.2} parent=11 // pred_region
        _
      $region16: #{lang_model_forward.2} parent=11 // pred_fallthru
        _
      // Predicated region
      $region17: #{lang_model_forward.2} parent=11 // pred_check
        %p143 = pneg %p78
      $region18: #{lang_model_forward.2} parent=11 // pred_check_branch
        %145 = sbr.rel (%p143) target = $region20
      $region19: #{lang_model_forward.2} parent=11 // pred_region
        _
      $region20: #{lang_model_forward.2} parent=11 // pred_fallthru
        _
      // Predicated region
      $region21: #{lang_model_forward.2} parent=11 // pred_check
        %p146 = pneg %p99
      $region22: #{lang_model_forward.2} parent=11 // pred_check_branch
        %148 = sbr.rel (%p146) target = $region24
      $region23: #{lang_model_forward.2} parent=11 // pred_region
        _
      $region24: #{lang_model_forward.2} parent=11 // pred_fallthru
        _
    $region12: #{lang_model_forward.2} parent=5 // pred_fallthru
      _
    %p149 = scmp.lt.s32.totalorder %s10, 2
    // Predicated region
    $region25: #{lang_model_forward.2} parent=5 // pred_check
      %p150 = pneg %p149
    $region26: #{lang_model_forward.2} parent=5 // pred_check_branch
      %152 = sbr.rel (%p150) target = $region28
    $region27: #{lang_model_forward.2} parent=5 // pred_region
      // Predicated region
      $region29: #{lang_model_forward.2} parent=27 // pred_check
        %p153 = pneg %p30
      $region30: #{lang_model_forward.2} parent=27 // pred_check_branch
        %155 = sbr.rel (%p153) target = $region32
      $region31: #{lang_model_forward.2} parent=27 // pred_region
        %s156 = smul.u32 2, %s10
        %p157 = scmp.lt.s32.totalorder %s156, 3
        %s158 = scalar_select %p157, %s156, 3
        %s159 = smul.addr %s158, 4
        %s160 = scalar_lea.vmem %s0, %s159
        %s161 = smul.u32 2, %s10
      $region32: #{lang_model_forward.2} parent=27 // pred_fallthru
        _
    $region28: #{lang_model_forward.2} parent=5 // pred_fallthru
      _
    %p162 = scmp.le.s32.totalorder 1, %s10
    %p163 = scmp.lt.s32.totalorder %s10, 3
    %p164 = pnand %p162, %p163
    %p165 = pneg %p164
    // Predicated region
    $region33: #{lang_model_forward.2} parent=5 // pred_check
      _
    $region34: #{lang_model_forward.2} parent=5 // pred_check_branch
      %167 = sbr.rel (%p164) target = $region36
    $region35: #{lang_model_forward.2} parent=5 // pred_region
      %s168 = ssub.s32 %s10, 1
      %s169 = smul.u32 2, %s15
      %p170 = scmp.lt.s32.totalorder %s169, 3
      %s171 = scalar_select %p170, %s169, 3
      %s172 = smul.addr %s171, 4
      %s173 = scalar_lea.vmem %s0, %s172
      %p174 = pneg %p36
      %p175 = pneg %p33
      %p176 = pneg %p57
      %p177 = pneg %p54
      %p178 = pneg %p78
      %p179 = pneg %p75
      %p180 = pneg %p99
      %p181 = pneg %p96
      %p182 = pneg %p125
      %p183 = pneg %p122
      %s184 = smul.u32 2, %s15
      %p185 = scmp.lt.s32.totalorder %s184, 3
      %s186 = scalar_select %p185, %s184, 3
      %s187 = smul.addr %s186, 4
      %s188 = scalar_lea.vmem %s4, %s187
      %s189 = smul.u32 2, %s15
      %p190 = scmp.lt.s32.totalorder %s189, 3
      %s191 = scalar_select %p190, %s189, 3
      %s192 = smul.addr %s191, 4
      %s193 = scalar_lea.vmem %s0, %s192
      %s194 = smul.u32 2, %s15
      %s195 = smul.u32 2, %s15
      %p196 = scmp.lt.s32.totalorder %s195, 3
      %s197 = scalar_select %p196, %s195, 3
      %s198 = smul.addr %s197, 4
      %s199 = scalar_lea.vmem %s4, %s198
      %s200 = smul.u32 2, %s15
      %p202 = scmp.eq.s32.totalorder %s15, 0
      // Predicated region
      $region37: #{lang_model_forward.2} parent=35 // pred_check
        %p203 = pneg %p202
      $region38: #{lang_model_forward.2} parent=35 // pred_check_branch
        %205 = sbr.rel (%p203) target = $region40
      $region39: #{lang_model_forward.2} parent=35 // pred_region
        %vm206 = vcmask 254976
        %207 = vst.msk [vmem:[#allocation2] sm:$0x3] %vm206, 0.0
        %208 = vst.msk [vmem:[#allocation3] sm:$0x3] %vm206, 0.0
      $region40: #{lang_model_forward.2} parent=35 // pred_fallthru
        _
      %v209 = vld [vmem:[%s193] sm:$0xf]
      %v210 = vld [vmem:[%s193 + $0x4] sm:$0xf]
      %v211 = vld [vmem:[%s1] sm:$0xf]
      %v212 = vld [vmem:[%s1 + $0x4] sm:$0xf]
      %v213 = vld [vmem:[%s1 + $0x8] sm:$0xf]
      %v214 = vld [vmem:[%s1 + $0xc] sm:$0xf]
      %v215 = vld [vmem:[%s3] sm:$0x1]
      %v217 = vlaneseq
      %v218 = vshrl.u32 %v217, 7
      %v219 = vsub.s32 0, %v218
      %v220 = vrot.slane %v215, %v219
      %v224 = vunpack.c.l.b16 %v209
      %v225 = vunpack.c.l.b16 %v210
      %v226 = vpack.c.b16 %v225, %v224
      %v231 = vunpack.c.l.b16 %v211
      %v232 = vunpack.c.l.b16 %v212
      %v233 = vunpack.c.l.b16 %v213
      %v234 = vunpack.c.l.b16 %v214
      %v235 = vpack.c.b16 %v232, %v231
      %v236 = vpack.c.b16 %v234, %v233
      %vm239 = vcmask 261120
      %v241 = vsel %vm239, %v226, 0
      %243 = vmatprep.subr.bf16.mxu0 0
      %244 = vmatpush1.bf16.msra.mxu0 %v235
      %245 = vmatprep.subr.bf16.mxu0 0
      %246 = vmatpush1.bf16.msra.mxu0 %v236
      %247 = vmatprep.subr.bf16.mxu0 0
      %248 = vmatpush1.bf16.msra.mxu0 0
      %249 = vmatprep.subr.bf16.mxu0 0
      %250 = vmatpush1.bf16.msra.mxu0 0
      %251 = vmatprep.subr.bf16.mxu0 0
      %252 = vmatpush1.bf16.msra.mxu0 0
      %253 = vmatprep.subr.bf16.mxu0 0
      %254 = vmatpush1.bf16.msra.mxu0 0
      %255 = vmatprep.subr.bf16.mxu0 0
      %256 = vmatpush1.bf16.msra.mxu0 0
      %257 = vmatprep.subr.bf16.mxu0 0
      %258 = vmatpush1.bf16.msra.mxu0 0
      %259 = vmatprep.subr.bf16.mxu0 0
      %260 = vmatpush1.bf16.msra.mxu0 0
      %261 = vmatprep.subr.bf16.mxu0 0
      %262 = vmatpush1.bf16.msra.mxu0 0
      %263 = vmatprep.subr.bf16.mxu0 0
      %264 = vmatpush1.bf16.msra.mxu0 0
      %265 = vmatprep.subr.bf16.mxu0 0
      %266 = vmatpush1.bf16.msra.mxu0 0
      %267 = vmatprep.subr.bf16.mxu0 0
      %268 = vmatpush1.bf16.msra.mxu0 0
      %269 = vmatprep.subr.bf16.mxu0 0
      %270 = vmatpush1.bf16.msra.mxu0 0
      %271 = vmatprep.subr.bf16.mxu0 0
      %272 = vmatpush1.bf16.msra.mxu0 0
      %273 = vmatprep.subr.bf16.mxu0 0
      %274 = vmatpush1.bf16.msra.mxu0 0
      %275 = vmatprep.mubr.bf16.mxu0 0
      %276 = vmatmul.mubr.bf16.gmra.mrb[0].mxu0 %v241
      %v277 = vpop.f32.mrb[0].mxu0
      %v278 = vadd.f32 %v220, %v277
      %v279 = vpop.f32.mrb[0].mxu0
      %v280 = vpop.f32.mrb[0].mxu0
      %v281 = vadd.f32 %v220, %v280
      %v282 = vpop.f32.mrb[0].mxu0
      %283 = vdwg.mxu0
      %v284 = vld [vmem:[%s2] sm:$0xf]
      %v285 = vld [vmem:[%s2 + $0x4] sm:$0xf]
      %v286 = vld [vmem:[%s2 + $0x8] sm:$0xf]
      %v287 = vld [vmem:[%s2 + $0xc] sm:$0xf]
      %v288 = vld [vmem:[#allocation2] sm:$0x3]
      %v289 = vld [vmem:[#allocation3] sm:$0x3]
      %v290 = vpack.c.bf16 %v288, %v288
      %v295 = vunpack.c.l.b16 %v284
      %v296 = vunpack.c.l.b16 %v285
      %v297 = vunpack.c.l.b16 %v286
      %v298 = vunpack.c.l.b16 %v287
      %v299 = vpack.c.b16 %v296, %v295
      %v300 = vpack.c.b16 %v298, %v297
      %v304 = vsel %vm239, %v290, 0
      %306 = vmatprep.subr.bf16.mxu0 0
      %307 = vmatpush1.bf16.msra.mxu0 %v299
      %308 = vmatprep.subr.bf16.mxu0 0
      %309 = vmatpush1.bf16.msra.mxu0 %v300
      %310 = vmatprep.subr.bf16.mxu0 0
      %311 = vmatpush1.bf16.msra.mxu0 0
      %312 = vmatprep.subr.bf16.mxu0 0
      %313 = vmatpush1.bf16.msra.mxu0 0
      %314 = vmatprep.subr.bf16.mxu0 0
      %315 = vmatpush1.bf16.msra.mxu0 0
      %316 = vmatprep.subr.bf16.mxu0 0
      %317 = vmatpush1.bf16.msra.mxu0 0
      %318 = vmatprep.subr.bf16.mxu0 0
      %319 = vmatpush1.bf16.msra.mxu0 0
      %320 = vmatprep.subr.bf16.mxu0 0
      %321 = vmatpush1.bf16.msra.mxu0 0
      %322 = vmatprep.subr.bf16.mxu0 0
      %323 = vmatpush1.bf16.msra.mxu0 0
      %324 = vmatprep.subr.bf16.mxu0 0
      %325 = vmatpush1.bf16.msra.mxu0 0
      %326 = vmatprep.subr.bf16.mxu0 0
      %327 = vmatpush1.bf16.msra.mxu0 0
      %328 = vmatprep.subr.bf16.mxu0 0
      %329 = vmatpush1.bf16.msra.mxu0 0
      %330 = vmatprep.subr.bf16.mxu0 0
      %331 = vmatpush1.bf16.msra.mxu0 0
      %332 = vmatprep.subr.bf16.mxu0 0
      %333 = vmatpush1.bf16.msra.mxu0 0
      %334 = vmatprep.subr.bf16.mxu0 0
      %335 = vmatpush1.bf16.msra.mxu0 0
      %336 = vmatprep.subr.bf16.mxu0 0
      %337 = vmatpush1.bf16.msra.mxu0 0
      %338 = vmatprep.mubr.bf16.mxu0 0
      %339 = vmatmul.mubr.bf16.gmra.mrb[0].mxu0 %v304
      %v340 = vpop.f32.mrb[0].mxu0
      %v341 = vadd.f32 0.0, %v340
      %v342 = vpop.f32.mrb[0].mxu0
      %v343 = vpop.f32.mrb[0].mxu0
      %v344 = vpop.f32.mrb[0].mxu0
      %345 = vdwg.mxu0
      %v346 = vadd.f32 %v278, %v341
      %v347 = vxor.u32 %v346, 2147483648
      %v348 = vmul.f32 %v347, 1.442695
      %v349 = vpow.pop %v348
      %v350 = vadd.f32 %v349, 1.0
      %v351 = vrcp.pop %v350
      %v352 = vmul.f32 1.0, %v351
      %v353 = vtanh.pop %v346
      %355 = vrot.lane.b32.xlu0 %v289, 32
      %v356 = vpop.permute.xlu0 %355
      %v358 = vmul.f32 %v352, %v356
      %360 = vrot.lane.b32.xlu0 %v353, 64
      %v361 = vpop.permute.xlu0 %360
      %v363 = vmul.f32 %v352, %v361
      %365 = vrot.lane.b32.xlu0 %v363, 32
      %v366 = vpop.permute.xlu0 %365
      %v368 = vadd.f32 %v358, %v366
      %v369 = vtanh.pop %v368
      %371 = vrot.lane.b32.xlu0 %v369, 64
      %v372 = vpop.permute.xlu0 %371
      %v374 = vmul.f32 %v352, %v372
      %v375 = vpack.c.bf16 %v374, %v374
      %v377 = vunpack.c.l.b16 %v375
      %v378 = vpack.c.b16 %v377, %v377
      %379 = vrot.lane.b32.xlu0 %v378, 32
      %v380 = vpop.permute.xlu0 %379
      %vm382 = vcmask 253952
      %383 = vst.msk [vmem:[%s199] sm:$0x1] %vm382, %v380
      %384 = vrot.lane.b32.xlu0 %v375, 32
      %v385 = vpop.permute.xlu0 %384
      %v387 = vsel %vm239, %v385, 0
      %389 = vmatprep.subr.bf16.mxu0 0
      %390 = vmatpush1.bf16.msra.mxu0 %v299
      %391 = vmatprep.subr.bf16.mxu0 0
      %392 = vmatpush1.bf16.msra.mxu0 %v300
      %393 = vmatprep.subr.bf16.mxu0 0
      %394 = vmatpush1.bf16.msra.mxu0 0
      %395 = vmatprep.subr.bf16.mxu0 0
      %396 = vmatpush1.bf16.msra.mxu0 0
      %397 = vmatprep.subr.bf16.mxu0 0
      %398 = vmatpush1.bf16.msra.mxu0 0
      %399 = vmatprep.subr.bf16.mxu0 0
      %400 = vmatpush1.bf16.msra.mxu0 0
      %401 = vmatprep.subr.bf16.mxu0 0
      %402 = vmatpush1.bf16.msra.mxu0 0
      %403 = vmatprep.subr.bf16.mxu0 0
      %404 = vmatpush1.bf16.msra.mxu0 0
      %405 = vmatprep.subr.bf16.mxu0 0
      %406 = vmatpush1.bf16.msra.mxu0 0
      %407 = vmatprep.subr.bf16.mxu0 0
      %408 = vmatpush1.bf16.msra.mxu0 0
      %409 = vmatprep.subr.bf16.mxu0 0
      %410 = vmatpush1.bf16.msra.mxu0 0
      %411 = vmatprep.subr.bf16.mxu0 0
      %412 = vmatpush1.bf16.msra.mxu0 0
      %413 = vmatprep.subr.bf16.mxu0 0
      %414 = vmatpush1.bf16.msra.mxu0 0
      %415 = vmatprep.subr.bf16.mxu0 0
      %416 = vmatpush1.bf16.msra.mxu0 0
      %417 = vmatprep.subr.bf16.mxu0 0
      %418 = vmatpush1.bf16.msra.mxu0 0
      %419 = vmatprep.subr.bf16.mxu0 0
      %420 = vmatpush1.bf16.msra.mxu0 0
      %421 = vmatprep.mubr.bf16.mxu0 0
      %422 = vmatmul.mubr.bf16.gmra.mrb[0].mxu0 %v387
      %v423 = vpop.f32.mrb[0].mxu0
      %v424 = vadd.f32 0.0, %v423
      %v425 = vpop.f32.mrb[0].mxu0
      %v426 = vpop.f32.mrb[0].mxu0
      %v427 = vpop.f32.mrb[0].mxu0
      %428 = vdwg.mxu0
      %v430 = vrot.slane %v424, 6
      %v432 = vadd.f32 %v278, %v430
      %v433 = vxor.u32 %v432, 2147483648
      %v434 = vmul.f32 %v433, 1.442695
      %v435 = vpow.pop %v434
      %v436 = vadd.f32 %v435, 1.0
      %v437 = vrcp.pop %v436
      %v438 = vmul.f32 1.0, %v437
      %v439 = vtanh.pop %v432
      %v441 = vrot.slane %v368, 6
      %v443 = vmul.f32 %v438, %v441
      %445 = vrot.lane.b32.xlu0 %v439, 64
      %v446 = vpop.permute.xlu0 %445
      %v448 = vmul.f32 %v438, %v446
      %450 = vrot.lane.b32.xlu0 %v448, 32
      %v451 = vpop.permute.xlu0 %450
      %v453 = vadd.f32 %v443, %v451
      %v454 = vtanh.pop %v453
      %456 = vrot.lane.b32.xlu0 %v454, 64
      %v457 = vpop.permute.xlu0 %456
      %v459 = vmul.f32 %v438, %v457
      %v460 = vpack.c.bf16 %v459, %v459
      %v462 = vunpack.c.l.b16 %v460
      %v463 = vpack.c.b16 %v462, %v462
      %464 = vrot.lane.b32.xlu0 %v463, 32
      %v465 = vpop.permute.xlu0 %464
      %vm467 = vcmask 254977
      %468 = vst.msk [vmem:[%s199] sm:$0x2] %vm467, %v465
      %v469 = vrot.slane %v460, 1
      %470 = vrot.lane.b32.xlu0 %v469, 32
      %v471 = vpop.permute.xlu0 %470
      %v473 = vsel %vm239, %v471, 0
      %475 = vmatprep.subr.bf16.mxu0 0
      %476 = vmatpush1.bf16.msra.mxu0 %v299
      %477 = vmatprep.subr.bf16.mxu0 0
      %478 = vmatpush1.bf16.msra.mxu0 %v300
      %479 = vmatprep.subr.bf16.mxu0 0
      %480 = vmatpush1.bf16.msra.mxu0 0
      %481 = vmatprep.subr.bf16.mxu0 0
      %482 = vmatpush1.bf16.msra.mxu0 0
      %483 = vmatprep.subr.bf16.mxu0 0
      %484 = vmatpush1.bf16.msra.mxu0 0
      %485 = vmatprep.subr.bf16.mxu0 0
      %486 = vmatpush1.bf16.msra.mxu0 0
      %487 = vmatprep.subr.bf16.mxu0 0
      %488 = vmatpush1.bf16.msra.mxu0 0
      %489 = vmatprep.subr.bf16.mxu0 0
      %490 = vmatpush1.bf16.msra.mxu0 0
      %491 = vmatprep.subr.bf16.mxu0 0
      %492 = vmatpush1.bf16.msra.mxu0 0
      %493 = vmatprep.subr.bf16.mxu0 0
      %494 = vmatpush1.bf16.msra.mxu0 0
      %495 = vmatprep.subr.bf16.mxu0 0
      %496 = vmatpush1.bf16.msra.mxu0 0
      %497 = vmatprep.subr.bf16.mxu0 0
      %498 = vmatpush1.bf16.msra.mxu0 0
      %499 = vmatprep.subr.bf16.mxu0 0
      %500 = vmatpush1.bf16.msra.mxu0 0
      %501 = vmatprep.subr.bf16.mxu0 0
      %502 = vmatpush1.bf16.msra.mxu0 0
      %503 = vmatprep.subr.bf16.mxu0 0
      %504 = vmatpush1.bf16.msra.mxu0 0
      %505 = vmatprep.subr.bf16.mxu0 0
      %506 = vmatpush1.bf16.msra.mxu0 0
      %507 = vmatprep.mubr.bf16.mxu0 0
      %508 = vmatmul.mubr.bf16.gmra.mrb[0].mxu0 %v473
      %v509 = vpop.f32.mrb[0].mxu0
      %v510 = vadd.f32 0.0, %v509
      %v511 = vpop.f32.mrb[0].mxu0
      %v512 = vpop.f32.mrb[0].mxu0
      %v513 = vpop.f32.mrb[0].mxu0
      %514 = vdwg.mxu0
      %v516 = vrot.slane %v510, 4
      %v518 = vadd.f32 %v278, %v516
      %v519 = vxor.u32 %v518, 2147483648
      %v520 = vmul.f32 %v519, 1.442695
      %v521 = vpow.pop %v520
      %v522 = vadd.f32 %v521, 1.0
      %v523 = vrcp.pop %v522
      %v524 = vmul.f32 1.0, %v523
      %v525 = vtanh.pop %v518
      %v527 = vrot.slane %v453, 6
      %v529 = vmul.f32 %v524, %v527
      %531 = vrot.lane.b32.xlu0 %v525, 64
      %v532 = vpop.permute.xlu0 %531
      %v534 = vmul.f32 %v524, %v532
      %536 = vrot.lane.b32.xlu0 %v534, 32
      %v537 = vpop.permute.xlu0 %536
      %v539 = vadd.f32 %v529, %v537
      %v540 = vtanh.pop %v539
      %542 = vrot.lane.b32.xlu0 %v540, 64
      %v543 = vpop.permute.xlu0 %542
      %v545 = vmul.f32 %v524, %v543
      %v546 = vpack.c.bf16 %v545, %v545
      %v548 = vunpack.c.l.b16 %v546
      %v549 = vpack.c.b16 %v548, %v548
      %550 = vrot.lane.b32.xlu0 %v549, 32
      %v551 = vpop.permute.xlu0 %550
      %vm553 = vcmask 256002
      %554 = vst.msk [vmem:[%s199] sm:$0x4] %vm553, %v551
      %v555 = vrot.slane %v546, 2
      %556 = vrot.lane.b32.xlu0 %v555, 32
      %v557 = vpop.permute.xlu0 %556
      %v559 = vsel %vm239, %v557, 0
      %561 = vmatprep.subr.bf16.mxu0 0
      %562 = vmatpush1.bf16.msra.mxu0 %v299
      %563 = vmatprep.subr.bf16.mxu0 0
      %564 = vmatpush1.bf16.msra.mxu0 %v300
      %565 = vmatprep.subr.bf16.mxu0 0
      %566 = vmatpush1.bf16.msra.mxu0 0
      %567 = vmatprep.subr.bf16.mxu0 0
      %568 = vmatpush1.bf16.msra.mxu0 0
      %569 = vmatprep.subr.bf16.mxu0 0
      %570 = vmatpush1.bf16.msra.mxu0 0
      %571 = vmatprep.subr.bf16.mxu0 0
      %572 = vmatpush1.bf16.msra.mxu0 0
      %573 = vmatprep.subr.bf16.mxu0 0
      %574 = vmatpush1.bf16.msra.mxu0 0
      %575 = vmatprep.subr.bf16.mxu0 0
      %576 = vmatpush1.bf16.msra.mxu0 0
      %577 = vmatprep.subr.bf16.mxu0 0
      %578 = vmatpush1.bf16.msra.mxu0 0
      %579 = vmatprep.subr.bf16.mxu0 0
      %580 = vmatpush1.bf16.msra.mxu0 0
      %581 = vmatprep.subr.bf16.mxu0 0
      %582 = vmatpush1.bf16.msra.mxu0 0
      %583 = vmatprep.subr.bf16.mxu0 0
      %584 = vmatpush1.bf16.msra.mxu0 0
      %585 = vmatprep.subr.bf16.mxu0 0
      %586 = vmatpush1.bf16.msra.mxu0 0
      %587 = vmatprep.subr.bf16.mxu0 0
      %588 = vmatpush1.bf16.msra.mxu0 0
      %589 = vmatprep.subr.bf16.mxu0 0
      %590 = vmatpush1.bf16.msra.mxu0 0
      %591 = vmatprep.subr.bf16.mxu0 0
      %592 = vmatpush1.bf16.msra.mxu0 0
      %593 = vmatprep.mubr.bf16.mxu0 0
      %594 = vmatmul.mubr.bf16.gmra.mrb[0].mxu0 %v559
      %v595 = vpop.f32.mrb[0].mxu0
      %v596 = vadd.f32 0.0, %v595
      %v597 = vpop.f32.mrb[0].mxu0
      %v598 = vpop.f32.mrb[0].mxu0
      %v599 = vpop.f32.mrb[0].mxu0
      %600 = vdwg.mxu0
      %v602 = vrot.slane %v596, 2
      %v604 = vadd.f32 %v278, %v602
      %v605 = vxor.u32 %v604, 2147483648
      %v606 = vmul.f32 %v605, 1.442695
      %v607 = vpow.pop %v606
      %v608 = vadd.f32 %v607, 1.0
      %v609 = vrcp.pop %v608
      %v610 = vmul.f32 1.0, %v609
      %v611 = vtanh.pop %v604
      %v613 = vrot.slane %v539, 6
      %v615 = vmul.f32 %v610, %v613
      %617 = vrot.lane.b32.xlu0 %v611, 64
      %v618 = vpop.permute.xlu0 %617
      %v620 = vmul.f32 %v610, %v618
      %622 = vrot.lane.b32.xlu0 %v620, 32
      %v623 = vpop.permute.xlu0 %622
      %v625 = vadd.f32 %v615, %v623
      %v626 = vtanh.pop %v625
      %628 = vrot.lane.b32.xlu0 %v626, 64
      %v629 = vpop.permute.xlu0 %628
      %v631 = vmul.f32 %v610, %v629
      %v632 = vpack.c.bf16 %v631, %v631
      %v634 = vunpack.c.l.b16 %v632
      %v635 = vpack.c.b16 %v634, %v634
      %636 = vrot.lane.b32.xlu0 %v635, 32
      %v637 = vpop.permute.xlu0 %636
      %vm639 = vcmask 257027
      %640 = vst.msk [vmem:[%s199] sm:$0x8] %vm639, %v637
      %v641 = vrot.slane %v632, 3
      %642 = vrot.lane.b32.xlu0 %v641, 32
      %v643 = vpop.permute.xlu0 %642
      %v645 = vsel %vm239, %v643, 0
      %647 = vmatprep.subr.bf16.mxu0 0
      %648 = vmatpush1.bf16.msra.mxu0 %v299
      %649 = vmatprep.subr.bf16.mxu0 0
      %650 = vmatpush1.bf16.msra.mxu0 %v300
      %651 = vmatprep.subr.bf16.mxu0 0
      %652 = vmatpush1.bf16.msra.mxu0 0
      %653 = vmatprep.subr.bf16.mxu0 0
      %654 = vmatpush1.bf16.msra.mxu0 0
      %655 = vmatprep.subr.bf16.mxu0 0
      %656 = vmatpush1.bf16.msra.mxu0 0
      %657 = vmatprep.subr.bf16.mxu0 0
      %658 = vmatpush1.bf16.msra.mxu0 0
      %659 = vmatprep.subr.bf16.mxu0 0
      %660 = vmatpush1.bf16.msra.mxu0 0
      %661 = vmatprep.subr.bf16.mxu0 0
      %662 = vmatpush1.bf16.msra.mxu0 0
      %663 = vmatprep.subr.bf16.mxu0 0
      %664 = vmatpush1.bf16.msra.mxu0 0
      %665 = vmatprep.subr.bf16.mxu0 0
      %666 = vmatpush1.bf16.msra.mxu0 0
      %667 = vmatprep.subr.bf16.mxu0 0
      %668 = vmatpush1.bf16.msra.mxu0 0
      %669 = vmatprep.subr.bf16.mxu0 0
      %670 = vmatpush1.bf16.msra.mxu0 0
      %671 = vmatprep.subr.bf16.mxu0 0
      %672 = vmatpush1.bf16.msra.mxu0 0
      %673 = vmatprep.subr.bf16.mxu0 0
      %674 = vmatpush1.bf16.msra.mxu0 0
      %675 = vmatprep.subr.bf16.mxu0 0
      %676 = vmatpush1.bf16.msra.mxu0 0
      %677 = vmatprep.subr.bf16.mxu0 0
      %678 = vmatpush1.bf16.msra.mxu0 0
      %679 = vmatprep.mubr.bf16.mxu0 0
      %680 = vmatmul.mubr.bf16.gmra.mrb[0].mxu0 %v645
      %v681 = vpop.f32.mrb[0].mxu0
      %v682 = vadd.f32 0.0, %v681
      %v683 = vpop.f32.mrb[0].mxu0
      %v684 = vpop.f32.mrb[0].mxu0
      %v685 = vpop.f32.mrb[0].mxu0
      %686 = vdwg.mxu0
      %v687 = vadd.f32 %v281, %v682
      %v688 = vxor.u32 %v687, 2147483648
      %v689 = vmul.f32 %v688, 1.442695
      %v690 = vpow.pop %v689
      %v691 = vadd.f32 %v690, 1.0
      %v692 = vrcp.pop %v691
      %v693 = vmul.f32 1.0, %v692
      %v694 = vtanh.pop %v687
      %v696 = vrot.slane %v625, 6
      %v698 = vmul.f32 %v693, %v696
      %700 = vrot.lane.b32.xlu0 %v694, 64
      %v701 = vpop.permute.xlu0 %700
      %v703 = vmul.f32 %v693, %v701
      %705 = vrot.lane.b32.xlu0 %v703, 32
      %v706 = vpop.permute.xlu0 %705
      %v708 = vadd.f32 %v698, %v706
      %v709 = vtanh.pop %v708
      %711 = vrot.lane.b32.xlu0 %v709, 64
      %v712 = vpop.permute.xlu0 %711
      %v714 = vmul.f32 %v693, %v712
      %v715 = vpack.c.bf16 %v714, %v714
      %v717 = vunpack.c.l.b16 %v715
      %v718 = vpack.c.b16 %v717, %v717
      %719 = vrot.lane.b32.xlu0 %v718, 32
      %v720 = vpop.permute.xlu0 %719
      %722 = vst.msk [vmem:[%s199 + $0x4] sm:$0x1] %vm382, %v720
      %723 = vrot.lane.b32.xlu0 %v715, 32
      %v724 = vpop.permute.xlu0 %723
      %v726 = vsel %vm239, %v724, 0
      %728 = vmatprep.subr.bf16.mxu0 0
      %729 = vmatpush1.bf16.msra.mxu0 %v299
      %730 = vmatprep.subr.bf16.mxu0 0
      %731 = vmatpush1.bf16.msra.mxu0 %v300
      %732 = vmatprep.subr.bf16.mxu0 0
      %733 = vmatpush1.bf16.msra.mxu0 0
      %734 = vmatprep.subr.bf16.mxu0 0
      %735 = vmatpush1.bf16.msra.mxu0 0
      %736 = vmatprep.subr.bf16.mxu0 0
      %737 = vmatpush1.bf16.msra.mxu0 0
      %738 = vmatprep.subr.bf16.mxu0 0
      %739 = vmatpush1.bf16.msra.mxu0 0
      %740 = vmatprep.subr.bf16.mxu0 0
      %741 = vmatpush1.bf16.msra.mxu0 0
      %742 = vmatprep.subr.bf16.mxu0 0
      %743 = vmatpush1.bf16.msra.mxu0 0
      %744 = vmatprep.subr.bf16.mxu0 0
      %745 = vmatpush1.bf16.msra.mxu0 0
      %746 = vmatprep.subr.bf16.mxu0 0
      %747 = vmatpush1.bf16.msra.mxu0 0
      %748 = vmatprep.subr.bf16.mxu0 0
      %749 = vmatpush1.bf16.msra.mxu0 0
      %750 = vmatprep.subr.bf16.mxu0 0
      %751 = vmatpush1.bf16.msra.mxu0 0
      %752 = vmatprep.subr.bf16.mxu0 0
      %753 = vmatpush1.bf16.msra.mxu0 0
      %754 = vmatprep.subr.bf16.mxu0 0
      %755 = vmatpush1.bf16.msra.mxu0 0
      %756 = vmatprep.subr.bf16.mxu0 0
      %757 = vmatpush1.bf16.msra.mxu0 0
      %758 = vmatprep.subr.bf16.mxu0 0
      %759 = vmatpush1.bf16.msra.mxu0 0
      %760 = vmatprep.mubr.bf16.mxu0 0
      %761 = vmatmul.mubr.bf16.gmra.mrb[0].mxu0 %v726
      %v762 = vpop.f32.mrb[0].mxu0
      %v763 = vadd.f32 0.0, %v762
      %v764 = vpop.f32.mrb[0].mxu0
      %v765 = vpop.f32.mrb[0].mxu0
      %v766 = vpop.f32.mrb[0].mxu0
      %767 = vdwg.mxu0
      %v769 = vrot.slane %v763, 6
      %v771 = vadd.f32 %v281, %v769
      %v772 = vxor.u32 %v771, 2147483648
      %v773 = vmul.f32 %v772, 1.442695
      %v774 = vpow.pop %v773
      %v775 = vadd.f32 %v774, 1.0
      %v776 = vrcp.pop %v775
      %v777 = vmul.f32 1.0, %v776
      %v778 = vtanh.pop %v771
      %v780 = vrot.slane %v708, 6
      %v782 = vmul.f32 %v777, %v780
      %784 = vrot.lane.b32.xlu0 %v778, 64
      %v785 = vpop.permute.xlu0 %784
      %v787 = vmul.f32 %v777, %v785
      %789 = vrot.lane.b32.xlu0 %v787, 32
      %v790 = vpop.permute.xlu0 %789
      %v792 = vadd.f32 %v782, %v790
      %v793 = vtanh.pop %v792
      %795 = vrot.lane.b32.xlu0 %v793, 64
      %v796 = vpop.permute.xlu0 %795
      %v798 = vmul.f32 %v777, %v796
      %v799 = vpack.c.bf16 %v798, %v798
      %v801 = vunpack.c.l.b16 %v799
      %v802 = vpack.c.b16 %v801, %v801
      %803 = vrot.lane.b32.xlu0 %v802, 32
      %v804 = vpop.permute.xlu0 %803
      %806 = vst.msk [vmem:[%s199 + $0x4] sm:$0x2] %vm467, %v804
      %v807 = vrot.slane %v799, 1
      %808 = vrot.lane.b32.xlu0 %v807, 32
      %v809 = vpop.permute.xlu0 %808
      %v811 = vsel %vm239, %v809, 0
      %813 = vmatprep.subr.bf16.mxu0 0
      %814 = vmatpush1.bf16.msra.mxu0 %v299
      %815 = vmatprep.subr.bf16.mxu0 0
      %816 = vmatpush1.bf16.msra.mxu0 %v300
      %817 = vmatprep.subr.bf16.mxu0 0
      %818 = vmatpush1.bf16.msra.mxu0 0
      %819 = vmatprep.subr.bf16.mxu0 0
      %820 = vmatpush1.bf16.msra.mxu0 0
      %821 = vmatprep.subr.bf16.mxu0 0
      %822 = vmatpush1.bf16.msra.mxu0 0
      %823 = vmatprep.subr.bf16.mxu0 0
      %824 = vmatpush1.bf16.msra.mxu0 0
      %825 = vmatprep.subr.bf16.mxu0 0
      %826 = vmatpush1.bf16.msra.mxu0 0
      %827 = vmatprep.subr.bf16.mxu0 0
      %828 = vmatpush1.bf16.msra.mxu0 0
      %829 = vmatprep.subr.bf16.mxu0 0
      %830 = vmatpush1.bf16.msra.mxu0 0
      %831 = vmatprep.subr.bf16.mxu0 0
      %832 = vmatpush1.bf16.msra.mxu0 0
      %833 = vmatprep.subr.bf16.mxu0 0
      %834 = vmatpush1.bf16.msra.mxu0 0
      %835 = vmatprep.subr.bf16.mxu0 0
      %836 = vmatpush1.bf16.msra.mxu0 0
      %837 = vmatprep.subr.bf16.mxu0 0
      %838 = vmatpush1.bf16.msra.mxu0 0
      %839 = vmatprep.subr.bf16.mxu0 0
      %840 = vmatpush1.bf16.msra.mxu0 0
      %841 = vmatprep.subr.bf16.mxu0 0
      %842 = vmatpush1.bf16.msra.mxu0 0
      %843 = vmatprep.subr.bf16.mxu0 0
      %844 = vmatpush1.bf16.msra.mxu0 0
      %845 = vmatprep.mubr.bf16.mxu0 0
      %846 = vmatmul.mubr.bf16.gmra.mrb[0].mxu0 %v811
      %v847 = vpop.f32.mrb[0].mxu0
      %v848 = vadd.f32 0.0, %v847
      %v849 = vpop.f32.mrb[0].mxu0
      %v850 = vpop.f32.mrb[0].mxu0
      %v851 = vpop.f32.mrb[0].mxu0
      %852 = vdwg.mxu0
      %v854 = vrot.slane %v848, 4
      %v856 = vadd.f32 %v281, %v854
      %v857 = vxor.u32 %v856, 2147483648
      %v858 = vmul.f32 %v857, 1.442695
      %v859 = vpow.pop %v858
      %v860 = vadd.f32 %v859, 1.0
      %v861 = vrcp.pop %v860
      %v862 = vmul.f32 1.0, %v861
      %v863 = vtanh.pop %v856
      %v865 = vrot.slane %v792, 6
      %v867 = vmul.f32 %v862, %v865
      %869 = vrot.lane.b32.xlu0 %v863, 64
      %v870 = vpop.permute.xlu0 %869
      %v872 = vmul.f32 %v862, %v870
      %874 = vrot.lane.b32.xlu0 %v872, 32
      %v875 = vpop.permute.xlu0 %874
      %v877 = vadd.f32 %v867, %v875
      %v878 = vtanh.pop %v877
      %880 = vrot.lane.b32.xlu0 %v878, 64
      %v881 = vpop.permute.xlu0 %880
      %v883 = vmul.f32 %v862, %v881
      %v884 = vpack.c.bf16 %v883, %v883
      %v886 = vunpack.c.l.b16 %v884
      %v887 = vpack.c.b16 %v886, %v886
      %888 = vrot.lane.b32.xlu0 %v887, 32
      %v889 = vpop.permute.xlu0 %888
      %891 = vst.msk [vmem:[%s199 + $0x4] sm:$0x4] %vm553, %v889
      %v892 = vrot.slane %v884, 2
      %893 = vrot.lane.b32.xlu0 %v892, 32
      %v894 = vpop.permute.xlu0 %893
      %v896 = vsel %vm239, %v894, 0
      %898 = vmatprep.subr.bf16.mxu0 0
      %899 = vmatpush1.bf16.msra.mxu0 %v299
      %900 = vmatprep.subr.bf16.mxu0 0
      %901 = vmatpush1.bf16.msra.mxu0 %v300
      %902 = vmatprep.subr.bf16.mxu0 0
      %903 = vmatpush1.bf16.msra.mxu0 0
      %904 = vmatprep.subr.bf16.mxu0 0
      %905 = vmatpush1.bf16.msra.mxu0 0
      %906 = vmatprep.subr.bf16.mxu0 0
      %907 = vmatpush1.bf16.msra.mxu0 0
      %908 = vmatprep.subr.bf16.mxu0 0
      %909 = vmatpush1.bf16.msra.mxu0 0
      %910 = vmatprep.subr.bf16.mxu0 0
      %911 = vmatpush1.bf16.msra.mxu0 0
      %912 = vmatprep.subr.bf16.mxu0 0
      %913 = vmatpush1.bf16.msra.mxu0 0
      %914 = vmatprep.subr.bf16.mxu0 0
      %915 = vmatpush1.bf16.msra.mxu0 0
      %916 = vmatprep.subr.bf16.mxu0 0
      %917 = vmatpush1.bf16.msra.mxu0 0
      %918 = vmatprep.subr.bf16.mxu0 0
      %919 = vmatpush1.bf16.msra.mxu0 0
      %920 = vmatprep.subr.bf16.mxu0 0
      %921 = vmatpush1.bf16.msra.mxu0 0
      %922 = vmatprep.subr.bf16.mxu0 0
      %923 = vmatpush1.bf16.msra.mxu0 0
      %924 = vmatprep.subr.bf16.mxu0 0
      %925 = vmatpush1.bf16.msra.mxu0 0
      %926 = vmatprep.subr.bf16.mxu0 0
      %927 = vmatpush1.bf16.msra.mxu0 0
      %928 = vmatprep.subr.bf16.mxu0 0
      %929 = vmatpush1.bf16.msra.mxu0 0
      %930 = vmatprep.mubr.bf16.mxu0 0
      %931 = vmatmul.mubr.bf16.gmra.mrb[0].mxu0 %v896
      %v932 = vpop.f32.mrb[0].mxu0
      %v933 = vadd.f32 0.0, %v932
      %v934 = vpop.f32.mrb[0].mxu0
      %v935 = vpop.f32.mrb[0].mxu0
      %v936 = vpop.f32.mrb[0].mxu0
      %937 = vdwg.mxu0
      %v939 = vrot.slane %v933, 2
      %v941 = vadd.f32 %v281, %v939
      %v942 = vxor.u32 %v941, 2147483648
      %v943 = vmul.f32 %v942, 1.442695
      %v944 = vpow.pop %v943
      %v945 = vadd.f32 %v944, 1.0
      %v946 = vrcp.pop %v945
      %v947 = vmul.f32 1.0, %v946
      %v948 = vtanh.pop %v941
      %v950 = vrot.slane %v877, 6
      %v952 = vmul.f32 %v947, %v950
      %954 = vrot.lane.b32.xlu0 %v948, 64
      %v955 = vpop.permute.xlu0 %954
      %v957 = vmul.f32 %v947, %v955
      %959 = vrot.lane.b32.xlu0 %v957, 32
      %v960 = vpop.permute.xlu0 %959
      %v962 = vadd.f32 %v952, %v960
      %v963 = vtanh.pop %v962
      %965 = vrot.lane.b32.xlu0 %v963, 64
      %v966 = vpop.permute.xlu0 %965
      %v968 = vmul.f32 %v947, %v966
      %v969 = vpack.c.bf16 %v968, %v968
      %v971 = vunpack.c.l.b16 %v969
      %v972 = vpack.c.b16 %v971, %v971
      %973 = vrot.lane.b32.xlu0 %v972, 32
      %v974 = vpop.permute.xlu0 %973
      %976 = vst.msk [vmem:[%s199 + $0x4] sm:$0x8] %vm639, %v974
      %978 = vrot.lane.b32.xlu0 %v968, 32
      %v979 = vpop.permute.xlu0 %978
      %vm981 = vcmask 261126
      %982 = vst.msk [vmem:[#allocation2 - $0x6] sm:$0xc0] %vm981, %v979
      %984 = vrot.lane.b32.xlu0 %v962, 96
      %v985 = vpop.permute.xlu0 %984
      %987 = vst.msk [vmem:[#allocation3 - $0x6] sm:$0xc0] %vm981, %v985
      %s988 = smul.u32 2, %s15
      %p989 = scmp.lt.s32.totalorder %s988, 3
      %s990 = scalar_select %p989, %s988, 3
      %s991 = smul.addr %s990, 4
      %s992 = scalar_lea.vmem %s4, %s991
      // Predicated region
      $region41: #{lang_model_forward.2} parent=35 // pred_check
        %p993 = pneg %p122
      $region42: #{lang_model_forward.2} parent=35 // pred_check_branch
        %995 = sbr.rel (%p993) target = $region44
      $region43: #{lang_model_forward.2} parent=35 // pred_region
        %s996 = smul.u32 2, %s15
      $region44: #{lang_model_forward.2} parent=35 // pred_fallthru
        _
    $region36: #{lang_model_forward.2} parent=5 // pred_fallthru
      _
    %p997 = scmp.le.s32.totalorder 2, %s10
    // Predicated region
    $region45: #{lang_model_forward.2} parent=5 // pred_check
      %p998 = pneg %p997
    $region46: #{lang_model_forward.2} parent=5 // pred_check_branch
      %1000 = sbr.rel (%p998) target = $region48
    $region47: #{lang_model_forward.2} parent=5 // pred_region
      %s1001 = ssub.s32 %s10, 2
      // Predicated region
      $region49: #{lang_model_forward.2} parent=47 // pred_check
        %p1002 = pneg %p128
      $region50: #{lang_model_forward.2} parent=47 // pred_check_branch
        %1004 = sbr.rel (%p1002) target = $region52
      $region51: #{lang_model_forward.2} parent=47 // pred_region
        %s1005 = smul.u32 2, %s16
        %p1006 = scmp.lt.s32.totalorder %s1005, 3
        %s1007 = scalar_select %p1006, %s1005, 3
        %s1008 = smul.addr %s1007, 4
        %s1009 = scalar_lea.vmem %s4, %s1008
      $region52: #{lang_model_forward.2} parent=47 // pred_fallthru
        _
    $region48: #{lang_model_forward.2} parent=5 // pred_fallthru
      _
  $region6: #{lang_model_forward.2} parent=0 // loop_footer
    %s14 = sadd.s32 1, %s10
  $region7: #{lang_model_forward.2} parent=0 // loop_footer_branch
    %9 = sbr.rel target = $region3
  $region8: #{lang_model_forward.2} parent=0 // loop_exit
    _

</llo_original>
